<compile_context>
chip_gen: v6e
topology: v6e:2x2x1
jax: 0.10.0
libtpu: 0.0.40
codegen_flags: <defaults>
</compile_context>

<pallas_src>
import numpy as np
import jax
import jax.numpy as jnp
from jax.experimental import pallas as pl
from jax.experimental.pallas import tpu as pltpu

SE_RATIO = 4
BN_EPS = 2e-5
GROUP_BASE = 8

MAX_TILE_ROWS = 4096      # hard cap on rows per grid step
SUBLANE = 16              # bf16 sublane packing multiple
MIN_GRID_STEPS = 2        # keep both v7x TensorCores busy on the "parallel" axis


def _vmem_limit_bytes():
    """Chip-aware scoped-VMEM cap: <=48 MiB on v7x (64 MiB physical), up to 96 MiB
    on v5e/v6e (128 MiB physical). Conservative fallback if the query fails."""
    cap = None
    try:
        cap = getattr(pltpu.get_tpu_info(), "vmem_capacity_bytes", None)
    except Exception:
        cap = None
    if not cap:
        cap = 64 * 1024 * 1024            # assume smallest generation (v7x) if unknown
    return int(min(96 * 1024 * 1024, max(32 * 1024 * 1024, (cap * 3) // 4)))


VMEM_LIMIT_BYTES = _vmem_limit_bytes()
_COMPILER_PARAMS = pltpu.CompilerParams(
    dimension_semantics=("parallel",),
    vmem_limit_bytes=VMEM_LIMIT_BYTES)


# ----------------------------- kernel helpers -------------------------------

def _affine_prelu(y, aff):
    """y * scale + shift, then PReLU.  aff rows: [scale, shift, alpha] (f32)."""
    y = y * aff[0:1, :] + aff[1:2, :]
    return jnp.where(y > 0, y, y * aff[2:3, :])


def _sep_chain(p_bf16, wdw, aff_dw, wpw, aff_pw):
    """Separable_Conv2d core: (folded-tap dw matmul -> BN -> PReLU) ->
    (1x1 pw matmul -> BN -> act).  Everything stays in vregs (f32 accum)."""
    h = jnp.dot(p_bf16, wdw, preferred_element_type=jnp.float32)
    h = _affine_prelu(h, aff_dw)
    z = jnp.dot(h.astype(jnp.bfloat16), wpw, preferred_element_type=jnp.float32)
    return _affine_prelu(z, aff_pw)


# ----------------------------- Pallas kernels --------------------------------

def _conv_bn_prelu_kernel(p_ref, w_ref, aff_ref, o_ref):
    """conv (taps folded into K) + folded BN + PReLU.
    p_ref: (TM, K) bf16 | w_ref: (K, Cout) bf16 | aff_ref: (3, Cout) f32."""
    y = jnp.dot(p_ref[...], w_ref[...], preferred_element_type=jnp.float32)
    o_ref[...] = _affine_prelu(y, aff_ref[...]).astype(o_ref.dtype)


def _dual_sep_kernel(p_ref, wdw_ref, affdw_ref, wpw_ref, affpw_ref, o_ref):
    """Shortcut + sep1 branches packed into one matmul chain.
    wdw: (K, 2C) column-concat, wpw: (2C, 2C) block-diagonal.
    Output (TM, 2C) bf16 = [shortcut | sep1]; dw intermediates never touch HBM."""
    o_ref[...] = _sep_chain(p_ref[...], wdw_ref[...], affdw_ref[...],
                            wpw_ref[...], affpw_ref[...]).astype(o_ref.dtype)


def _sep_se_res_kernel(p_ref, sc_ref,
                       wdw_ref, affdw_ref, wpw_ref, affpw_ref,
                       w1_ref, b1a1_ref, w2_ref, b2_ref, falpha_ref, o_ref):
    """sep2 (dw+pw) + Se_block + residual add + final PReLU; one batch element
    per grid step.  p_ref: (1, HW, K) bf16 | sc_ref: (1, HW, C) bf16 | o_ref f32."""
    z = _sep_chain(p_ref[0], wdw_ref[...], affdw_ref[...],
                   wpw_ref[...], affpw_ref[...])                      # (HW, C) f32
    hw = z.shape[0]
    s = jnp.sum(z, axis=0, keepdims=True) * (1.0 / hw)                # global avg pool
    h = jnp.dot(s, w1_ref[...], preferred_element_type=jnp.float32) + b1a1_ref[0:1, :]
    h = jnp.where(h > 0, h, h * b1a1_ref[1:2, :])                     # PReLU
    g = jnp.dot(h, w2_ref[...], preferred_element_type=jnp.float32) + b2_ref[...]
    g = jax.nn.sigmoid(g)                                             # (1, C) gate (EUP)
    y = z * g + sc_ref[0].astype(jnp.float32)                         # SE scale + residual
    o_ref[0] = jnp.where(y > 0, y, y * falpha_ref[...])               # final PReLU


# ----------------------------- pallas_call wrappers ---------------------------

def _full_spec(shape):
    nd = len(shape)
    return pl.BlockSpec(tuple(int(s) for s in shape), lambda i, _nd=nd: (0,) * _nd)


def _pad_rows(x, mult):
    m = x.shape[0]
    mp = ((m + mult - 1) // mult) * mult
    if mp != m:
        x = jnp.pad(x, ((0, mp - m), (0, 0)))
    return x, m


def _choose_tile(M, row_bytes):
    """Largest row tile that (double-buffered) fits in ~1/4 of the VMEM budget,
    rounded to a bf16 sublane multiple, with >= MIN_GRID_STEPS grid steps whenever
    M is big enough to split (keeps both v7x TensorCores busy)."""
    budget = VMEM_LIMIT_BYTES // 4
    cap = budget // max(1, 2 * row_bytes)
    cap = max(SUBLANE, min(MAX_TILE_ROWS, (cap // SUBLANE) * SUBLANE))
    if M >= MIN_GRID_STEPS * SUBLANE:
        steps = max(MIN_GRID_STEPS, -(-M // cap))
    else:
        steps = 1
    tile = -(-M // steps)
    return ((tile + SUBLANE - 1) // SUBLANE) * SUBLANE


def conv_bn_prelu_call(patches, w, aff, out_dtype):
    M, K = patches.shape
    Cout = w.shape[-1]
    row_bytes = K * patches.dtype.itemsize + Cout * jnp.dtype(out_dtype).itemsize
    tile = _choose_tile(M, row_bytes)
    patches, M = _pad_rows(patches, tile)
    Mp = patches.shape[0]
    out = pl.pallas_call(
        _conv_bn_prelu_kernel,
        out_shape=jax.ShapeDtypeStruct((Mp, Cout), out_dtype),
        grid_spec=pltpu.PrefetchScalarGridSpec(
            num_scalar_prefetch=0,
            grid=(Mp // tile,),
            in_specs=[pl.BlockSpec((tile, K), lambda i: (i, 0)),
                      _full_spec(w.shape),
                      _full_spec(aff.shape)],
            out_specs=pl.BlockSpec((tile, Cout), lambda i: (i, 0))),
        compiler_params=_COMPILER_PARAMS,
    )(patches, w, aff)
    return out[:M]


def dual_sep_call(patches, dual, out_dtype):
    """Run shortcut + sep1 as one packed matmul chain; returns (M, 2C) [shortcut|sep1]."""
    M, K = patches.shape
    C2 = dual['wpw'].shape[-1]
    row_bytes = K * patches.dtype.itemsize + C2 * jnp.dtype(out_dtype).itemsize
    tile = _choose_tile(M, row_bytes)
    patches, M = _pad_rows(patches, tile)
    Mp = patches.shape[0]
    out = pl.pallas_call(
        _dual_sep_kernel,
        out_shape=jax.ShapeDtypeStruct((Mp, C2), out_dtype),
        grid_spec=pltpu.PrefetchScalarGridSpec(
            num_scalar_prefetch=0,
            grid=(Mp // tile,),
            in_specs=[pl.BlockSpec((tile, K), lambda i: (i, 0)),
                      _full_spec(dual['wdw'].shape),
                      _full_spec(dual['aff_dw'].shape),
                      _full_spec(dual['wpw'].shape),
                      _full_spec(dual['aff_pw'].shape)],
            out_specs=pl.BlockSpec((tile, C2), lambda i: (i, 0))),
        compiler_params=_COMPILER_PARAMS,
    )(patches, dual['wdw'], dual['aff_dw'], dual['wpw'], dual['aff_pw'])
    return out[:M]


def sep_se_res_call(patches_nb, sc_nb, layer, se, final_alpha):
    N, HW, K = patches_nb.shape
    C = sc_nb.shape[-1]
    args = (patches_nb, sc_nb,
            layer['wdw'], layer['aff_dw'], layer['wpw'], layer['aff_pw'],
            se['w1'], se['b1a1'], se['w2'], se['b2'], final_alpha)
    return pl.pallas_call(
        _sep_se_res_kernel,
        out_shape=jax.ShapeDtypeStruct((N, HW, C), jnp.float32),
        grid_spec=pltpu.PrefetchScalarGridSpec(
            num_scalar_prefetch=0,
            grid=(N,),
            in_specs=[pl.BlockSpec((1, HW, K), lambda b: (b, 0, 0)),
                      pl.BlockSpec((1, HW, C), lambda b: (b, 0, 0))]
                    + [_full_spec(a.shape) for a in args[2:]],
            out_specs=pl.BlockSpec((1, HW, C), lambda b: (b, 0, 0))),
        compiler_params=_COMPILER_PARAMS,
    )(*args)


# ----------------------------- plain-JAX glue --------------------------------

def extract_patches(x, ksize, stride, pad):
    """NHWC -> (N*Ho*Wo, KH*KW*C) im2col rows; taps folded along the channel axis
    so the conv becomes a single matmul with K = KH*KW*C."""
    N, H, W, C = x.shape
    xp = jnp.pad(x, ((0, 0), (pad, pad), (pad, pad), (0, 0)))
    Ho = (H + 2 * pad - ksize) // stride + 1
    Wo = (W + 2 * pad - ksize) // stride + 1
    taps = []
    for i in range(ksize):
        for j in range(ksize):
            sl = jax.lax.slice(
                xp, (0, i, j, 0),
                (N, i + (Ho - 1) * stride + 1, j + (Wo - 1) * stride + 1, C),
                (1, stride, stride, 1))
            taps.append(sl.reshape(N * Ho * Wo, C))
    return jnp.concatenate(taps, axis=-1), (Ho, Wo)


def folded_weight(w_oihw, groups):
    """PyTorch conv weight (Cout, Cin//groups, KH, KW) -> (KH*KW*Cin, Cout) folded-tap
    matrix (grouped conv == block-diagonal dense matmul); row order matches
    extract_patches (tap-major, channel-minor)."""
    Cout, Cin_g, KH, KW = w_oihw.shape
    Cin = Cin_g * groups
    cout_g = Cout // groups
    taps = []
    for i in range(KH):
        for j in range(KW):
            m = jnp.zeros((Cin, Cout), jnp.float32)
            for g in range(groups):
                blk = w_oihw[g * cout_g:(g + 1) * cout_g, :, i, j].T
                m = m.at[g * Cin_g:(g + 1) * Cin_g,
                         g * cout_g:(g + 1) * cout_g].set(blk)
            taps.append(m)
    return jnp.concatenate(taps, axis=0)


def _blockdiag(a, b):
    Ka, Ca = a.shape
    Kb, Cb = b.shape
    out = jnp.zeros((Ka + Kb, Ca + Cb), a.dtype)
    out = out.at[:Ka, :Ca].set(a)
    out = out.at[Ka:, Ca:].set(b)
    return out


# ----------------------------- parameters ------------------------------------

def init_raw_params(key, num_filter=16, multiplier=1.0):
    C = int(num_filter * multiplier)
    assert C % GROUP_BASE == 0 and C % SE_RATIO == 0
    G = C // GROUP_BASE
    it = iter(jax.random.split(key, 64))

    def rn(shape, scale=0.1):
        return (scale * jax.random.normal(next(it), shape)).astype(jnp.float32)

    def bn(c):
        gamma = (1.0 + 0.1 * jax.random.normal(next(it), (c,))).astype(jnp.float32)
        beta = (0.1 * jax.random.normal(next(it), (c,))).astype(jnp.float32)
        mean = (0.1 * jax.random.normal(next(it), (c,))).astype(jnp.float32)
        var = (1.0 + jnp.abs(jax.random.normal(next(it), (c,)))).astype(jnp.float32)
        return (gamma, beta, mean, var)

    def prelu(c):
        return (0.25 + 0.05 * jax.random.normal(next(it), (c,))).astype(jnp.float32)

    ones = jnp.ones((C,), jnp.float32)  # PReLU slope 1.0 == identity (act_pw_out=False)
    raw = {
        'conv1':    {'w': rn((C, 3, 3, 3)),          'groups': 1, 'bn': bn(C), 'alpha': prelu(C)},
        'short_dw': {'w': rn((C, GROUP_BASE, 3, 3)), 'groups': G, 'bn': bn(C), 'alpha': prelu(C)},
        'short_pw': {'w': rn((C, C, 1, 1)),          'groups': 1, 'bn': bn(C), 'alpha': ones},
        'sep1_dw':  {'w': rn((C, GROUP_BASE, 3, 3)), 'groups': G, 'bn': bn(C), 'alpha': prelu(C)},
        'sep1_pw':  {'w': rn((C, C, 1, 1)),          'groups': 1, 'bn': bn(C), 'alpha': prelu(C)},
        'sep2_dw':  {'w': rn((C, GROUP_BASE, 3, 3)), 'groups': G, 'bn': bn(C), 'alpha': prelu(C)},
        'sep2_pw':  {'w': rn((C, C, 1, 1)),          'groups': 1, 'bn': bn(C), 'alpha': ones},
        'se': {'w1': rn((C // SE_RATIO, C, 1, 1)), 'b1': rn((C // SE_RATIO,)),
               'a1': prelu(C // SE_RATIO),
               'w2': rn((C, C // SE_RATIO, 1, 1)), 'b2': rn((C,))},
        'final_alpha': prelu(C),
    }
    return raw, C


def prep_conv_layer(raw):
    w = folded_weight(raw['w'], raw['groups']).astype(jnp.bfloat16)   # bf16 MXU operand
    gamma, beta, mean, var = raw['bn']
    scale = gamma / jnp.sqrt(var + BN_EPS)
    shift = beta - mean * scale
    aff = jnp.stack([scale, shift, raw['alpha']], axis=0).astype(jnp.float32)  # (3, Cout)
    return {'w': w, 'aff': aff}


def prep_params(raw):
    conv1 = prep_conv_layer(raw['conv1'])

    # ---- shortcut + sep1 packed into one matmul chain ----
    sdw, spw = prep_conv_layer(raw['short_dw']), prep_conv_layer(raw['short_pw'])
    zdw, zpw = prep_conv_layer(raw['sep1_dw']), prep_conv_layer(raw['sep1_pw'])
    dual = {'wdw': jnp.concatenate([sdw['w'], zdw['w']], axis=1),        # (9C, 2C)
            'aff_dw': jnp.concatenate([sdw['aff'], zdw['aff']], axis=1),  # (3, 2C)
            'wpw': _blockdiag(spw['w'], zpw['w']),                        # (2C, 2C)
            'aff_pw': jnp.concatenate([spw['aff'], zpw['aff']], axis=1)}  # (3, 2C)

    s2dw, s2pw = prep_conv_layer(raw['sep2_dw']), prep_conv_layer(raw['sep2_pw'])
    sep2 = {'wdw': s2dw['w'], 'aff_dw': s2dw['aff'],
            'wpw': s2pw['w'], 'aff_pw': s2pw['aff']}

    se = raw['se']
    kp = {'conv1': conv1, 'dual': dual, 'sep2': sep2,
          'se': {'w1': se['w1'][:, :, 0, 0].T.astype(jnp.float32),        # (C, C/4)
                 'b1a1': jnp.stack([se['b1'], se['a1']], axis=0),         # (2, C/4)
                 'w2': se['w2'][:, :, 0, 0].T.astype(jnp.float32),        # (C/4, C)
                 'b2': se['b2'][None, :]},
          'final_alpha': raw['final_alpha'][None, :]}
    return kp


# ----------------------------- forward pass -----------------------------------

def head_block_forward(kp, x_nchw):
    x = jnp.transpose(x_nchw, (0, 2, 3, 1)).astype(jnp.bfloat16)   # NCHW -> NHWC
    N = x.shape[0]
    # conv1 (3x3, s2) + bn1 + PReLU; y kept in bf16 (only re-consumed by the MXU).
    p1, (H1, W1) = extract_patches(x, 3, 2, 1)
    y = conv_bn_prelu_call(p1, kp['conv1']['w'], kp['conv1']['aff'], jnp.bfloat16)
    C = y.shape[-1]
    y = y.reshape(N, H1, W1, C)
    # VarGNet_Block (dim_match=False): shortcut & sep1 share the same stride-2 patches
    # of y and run as ONE packed matmul chain (dw intermediates stay in VMEM);
    # output [shortcut | sep1] in bf16 (halves the shortcut's HBM round trip).
    p2, (H2, W2) = extract_patches(y, 3, 2, 1)
    dual_out = dual_sep_call(p2, kp['dual'], jnp.bfloat16)          # (M2, 2C) bf16
    sc, z1 = dual_out[:, :C], dual_out[:, C:]
    # sep2 (stride 1) + SE + residual + final PReLU, fused, gridded over batch.
    p3, _ = extract_patches(z1.reshape(N, H2, W2, C), 3, 1, 1)
    out = sep_se_res_call(p3.reshape(N, H2 * W2, -1),
                          sc.reshape(N, H2 * W2, C),
                          kp['sep2'], kp['se'], kp['final_alpha'])
    return jnp.transpose(out.reshape(N, H2, W2, C), (0, 3, 1, 2))  # back to NCHW


# ----------------------------- pure-JAX reference ------------------------------

def _ref_cbp(x, raw, stride, pad):
    w = jnp.transpose(raw['w'], (2, 3, 1, 0))  # OIHW -> HWIO
    y = jax.lax.conv_general_dilated(
        x, w, (stride, stride), ((pad, pad), (pad, pad)),
        dimension_numbers=('NHWC', 'HWIO', 'NHWC'),
        feature_group_count=raw['groups'])
    gamma, beta, mean, var = raw['bn']
    y = (y - mean) * (gamma / jnp.sqrt(var + BN_EPS)) + beta
    return jnp.where(y > 0, y, y * raw['alpha'])


def reference_forward(raw, x_nchw):
    x = jnp.transpose(x_nchw, (0, 2, 3, 1)).astype(jnp.float32)
    y = _ref_cbp(x, raw['conv1'], 2, 1)
    sc = _ref_cbp(y, raw['short_dw'], 2, 1)
    sc = _ref_cbp(sc, raw['short_pw'], 1, 0)
    z = _ref_cbp(y, raw['sep1_dw'], 2, 1)
    z = _ref_cbp(z, raw['sep1_pw'], 1, 0)
    z = _ref_cbp(z, raw['sep2_dw'], 1, 1)
    z = _ref_cbp(z, raw['sep2_pw'], 1, 0)
    se = raw['se']
    s = jnp.mean(z, axis=(1, 2))
    h = s @ se['w1'][:, :, 0, 0].T + se['b1']
    h = jnp.where(h > 0, h, h * se['a1'])
    g = jax.nn.sigmoid(h @ se['w2'][:, :, 0, 0].T + se['b2'])
    out = z * g[:, None, None, :] + sc
    out = jnp.where(out > 0, out, out * raw['final_alpha'])
    return jnp.transpose(out, (0, 3, 1, 2))


# ----------------------------- main ---------------------------------------------

if __name__ == "__main__":
    key = jax.random.PRNGKey(0)
    p_key, x_key = jax.random.split(key)

    raw, C = init_raw_params(p_key, num_filter=16, multiplier=1.0)
    kp = prep_params(raw)

    x = jax.random.normal(x_key, (2, 3, 16, 16), jnp.float32)  # NCHW like PyTorch

    out = jax.block_until_ready(jax.jit(head_block_forward)(kp, x))
    assert out.shape == (2, C, 4, 4), out.shape

    ref = jax.block_until_ready(reference_forward(raw, x))
    # bf16 MXU operands + bf16 intermediates (incl. the bf16 shortcut) vs. an all-f32
    # reference -> inference-grade tolerance (~4%).
    np.testing.assert_allclose(np.asarray(out), np.asarray(ref), rtol=4e-2, atol=4e-2)

    print("KERNEL_OK")
</pallas_src>

<mosaic_0001>
module attributes {stable_mosaic.version = 11 : i64} {
  func.func @_conv_bn_prelu_kernel(%arg0: i32, %arg1: memref<64x27xbf16, #tpu.memory_space<vmem>>, %arg2: memref<27x16xbf16, #tpu.memory_space<vmem>>, %arg3: memref<3x16xf32, #tpu.memory_space<vmem>>, %arg4: memref<64x16xbf16, #tpu.memory_space<vmem>>) attributes {dimension_semantics = [#tpu.dimension_semantics<parallel>], iteration_bounds = array<i64: 2>, scalar_prefetch = 0 : i64, scratch_operands = 0 : i64, tpu.core_type = #tpu.core_type<tc>, window_params = [{transform_indices = @transform_0, window_bounds = array<i64: 64, 27>}, {pipeline_mode = #tpu.pipeline_mode<synchronous>, transform_indices = @transform_1, window_bounds = array<i64: 27, 16>}, {pipeline_mode = #tpu.pipeline_mode<synchronous>, transform_indices = @transform_2, window_bounds = array<i64: 3, 16>}, {transform_indices = @transform_3, window_bounds = array<i64: 64, 16>}]} {
    %c0 = arith.constant 0 : index
    %c0_0 = arith.constant 0 : index
    %0 = vector.load %arg1[%c0, %c0_0] : memref<64x27xbf16, #tpu.memory_space<vmem>>, vector<64x27xbf16>
    %c0_1 = arith.constant 0 : index
    %c0_2 = arith.constant 0 : index
    %1 = vector.load %arg2[%c0_1, %c0_2] : memref<27x16xbf16, #tpu.memory_space<vmem>>, vector<27x16xbf16>
    %cst = arith.constant dense<0.000000e+00> : vector<64x16xf32>
    %2 = tpu.matmul %0, %1, %cst {dimension_numbers = #tpu.dot_dimension_numbers<[1], [0], [0], [1], [0, 0, 1, 1], [], []>} : vector<64x27xbf16>, vector<27x16xbf16>, vector<64x16xf32> -> vector<64x16xf32>
    %c0_3 = arith.constant 0 : index
    %c0_4 = arith.constant 0 : index
    %3 = vector.load %arg3[%c0_3, %c0_4] : memref<3x16xf32, #tpu.memory_space<vmem>>, vector<3x16xf32>
    %4 = vector.extract_strided_slice %3 {offsets = [0, 0], sizes = [1, 16], strides = [1, 1]} : vector<3x16xf32> to vector<1x16xf32>
    %5 = vector.broadcast %4 : vector<1x16xf32> to vector<64x16xf32>
    %6 = arith.mulf %2, %5 : vector<64x16xf32>
    %7 = vector.extract_strided_slice %3 {offsets = [1, 0], sizes = [1, 16], strides = [1, 1]} : vector<3x16xf32> to vector<1x16xf32>
    %8 = vector.broadcast %7 : vector<1x16xf32> to vector<64x16xf32>
    %9 = arith.addf %6, %8 : vector<64x16xf32>
    %cst_5 = arith.constant 0.000000e+00 : f32
    %10 = vector.broadcast %cst_5 : f32 to vector<64x16xf32>
    %11 = arith.cmpf ogt, %9, %10 : vector<64x16xf32>
    %12 = vector.extract_strided_slice %3 {offsets = [2, 0], sizes = [1, 16], strides = [1, 1]} : vector<3x16xf32> to vector<1x16xf32>
    %13 = vector.broadcast %12 : vector<1x16xf32> to vector<64x16xf32>
    %14 = arith.mulf %9, %13 : vector<64x16xf32>
    %15 = arith.select %11, %9, %14 : vector<64x16xi1>, vector<64x16xf32>
    %16 = arith.truncf %15 : vector<64x16xf32> to vector<64x16xbf16>
    %c0_6 = arith.constant 0 : index
    %c0_7 = arith.constant 0 : index
    %17 = vector.load %arg4[%c0_6, %c0_7] : memref<64x16xbf16, #tpu.memory_space<vmem>>, vector<64x16xbf16>
    tpu.vector_store %arg4[%c0_6, %c0_7], %16 {strides = array<i32>} : memref<64x16xbf16, #tpu.memory_space<vmem>>, vector<64x16xbf16>,
    return
  }
  func.func @transform_0(%arg0: i32) -> (i32, i32) {
    %c0_i32 = arith.constant 0 : i32
    %c0_i32_0 = arith.constant 0 : i32
    return %arg0, %c0_i32 : i32, i32
  }
  func.func @transform_1(%arg0: i32) -> (i32, i32) {
    %c0_i32 = arith.constant 0 : i32
    %c0_i32_0 = arith.constant 0 : i32
    %c0_i32_1 = arith.constant 0 : i32
    return %c0_i32, %c0_i32_0 : i32, i32
  }
  func.func @transform_2(%arg0: i32) -> (i32, i32) {
    %c0_i32 = arith.constant 0 : i32
    %c0_i32_0 = arith.constant 0 : i32
    %c0_i32_1 = arith.constant 0 : i32
    return %c0_i32, %c0_i32_0 : i32, i32
  }
  func.func @transform_3(%arg0: i32) -> (i32, i32) {
    %c0_i32 = arith.constant 0 : i32
    %c0_i32_0 = arith.constant 0 : i32
    return %arg0, %c0_i32 : i32, i32
  }
}

module attributes {stable_mosaic.version = 11 : i64} {
  func.func @_dual_sep_kernel(%arg0: i32, %arg1: memref<16x144xbf16, #tpu.memory_space<vmem>>, %arg2: memref<144x32xbf16, #tpu.memory_space<vmem>>, %arg3: memref<3x32xf32, #tpu.memory_space<vmem>>, %arg4: memref<32x32xbf16, #tpu.memory_space<vmem>>, %arg5: memref<3x32xf32, #tpu.memory_space<vmem>>, %arg6: memref<16x32xbf16, #tpu.memory_space<vmem>>) attributes {dimension_semantics = [#tpu.dimension_semantics<parallel>], iteration_bounds = array<i64: 2>, scalar_prefetch = 0 : i64, scratch_operands = 0 : i64, tpu.core_type = #tpu.core_type<tc>, window_params = [{transform_indices = @transform_0, window_bounds = array<i64: 16, 144>}, {pipeline_mode = #tpu.pipeline_mode<synchronous>, transform_indices = @transform_1, window_bounds = array<i64: 144, 32>}, {pipeline_mode = #tpu.pipeline_mode<synchronous>, transform_indices = @transform_2, window_bounds = array<i64: 3, 32>}, {pipeline_mode = #tpu.pipeline_mode<synchronous>, transform_indices = @transform_3, window_bounds = array<i64: 32, 32>}, {pipeline_mode = #tpu.pipeline_mode<synchronous>, transform_indices = @transform_4, window_bounds = array<i64: 3, 32>}, {transform_indices = @transform_5, window_bounds = array<i64: 16, 32>}]} {
    %c0 = arith.constant 0 : index
    %c0_0 = arith.constant 0 : index
    %0 = vector.load %arg1[%c0, %c0_0] : memref<16x144xbf16, #tpu.memory_space<vmem>>, vector<16x144xbf16>
    %c0_1 = arith.constant 0 : index
    %c0_2 = arith.constant 0 : index
    %1 = vector.load %arg2[%c0_1, %c0_2] : memref<144x32xbf16, #tpu.memory_space<vmem>>, vector<144x32xbf16>
    %c0_3 = arith.constant 0 : index
    %c0_4 = arith.constant 0 : index
    %2 = vector.load %arg3[%c0_3, %c0_4] : memref<3x32xf32, #tpu.memory_space<vmem>>, vector<3x32xf32>
    %c0_5 = arith.constant 0 : index
    %c0_6 = arith.constant 0 : index
    %3 = vector.load %arg4[%c0_5, %c0_6] : memref<32x32xbf16, #tpu.memory_space<vmem>>, vector<32x32xbf16>
    %c0_7 = arith.constant 0 : index
    %c0_8 = arith.constant 0 : index
    %4 = vector.load %arg5[%c0_7, %c0_8] : memref<3x32xf32, #tpu.memory_space<vmem>>, vector<3x32xf32>
    %cst = arith.constant dense<0.000000e+00> : vector<16x32xf32>
    %5 = tpu.matmul %0, %1, %cst {dimension_numbers = #tpu.dot_dimension_numbers<[1], [0], [0], [1], [0, 0, 1, 1], [], []>} : vector<16x144xbf16>, vector<144x32xbf16>, vector<16x32xf32> -> vector<16x32xf32>
    %6 = vector.extract_strided_slice %2 {offsets = [0, 0], sizes = [1, 32], strides = [1, 1]} : vector<3x32xf32> to vector<1x32xf32>
    %7 = vector.broadcast %6 : vector<1x32xf32> to vector<16x32xf32>
    %8 = arith.mulf %5, %7 : vector<16x32xf32>
    %9 = vector.extract_strided_slice %2 {offsets = [1, 0], sizes = [1, 32], strides = [1, 1]} : vector<3x32xf32> to vector<1x32xf32>
    %10 = vector.broadcast %9 : vector<1x32xf32> to vector<16x32xf32>
    %11 = arith.addf %8, %10 : vector<16x32xf32>
    %cst_9 = arith.constant 0.000000e+00 : f32
    %12 = vector.broadcast %cst_9 : f32 to vector<16x32xf32>
    %13 = arith.cmpf ogt, %11, %12 : vector<16x32xf32>
    %14 = vector.extract_strided_slice %2 {offsets = [2, 0], sizes = [1, 32], strides = [1, 1]} : vector<3x32xf32> to vector<1x32xf32>
    %15 = vector.broadcast %14 : vector<1x32xf32> to vector<16x32xf32>
    %16 = arith.mulf %11, %15 : vector<16x32xf32>
    %17 = arith.select %13, %11, %16 : vector<16x32xi1>, vector<16x32xf32>
    %18 = arith.truncf %17 : vector<16x32xf32> to vector<16x32xbf16>
    %cst_10 = arith.constant dense<0.000000e+00> : vector<16x32xf32>
    %19 = tpu.matmul %18, %3, %cst_10 {dimension_numbers = #tpu.dot_dimension_numbers<[1], [0], [0], [1], [0, 0, 1, 1], [], []>} : vector<16x32xbf16>, vector<32x32xbf16>, vector<16x32xf32> -> vector<16x32xf32>
    %20 = vector.extract_strided_slice %4 {offsets = [0, 0], sizes = [1, 32], strides = [1, 1]} : vector<3x32xf32> to vector<1x32xf32>
    %21 = vector.broadcast %20 : vector<1x32xf32> to vector<16x32xf32>
    %22 = arith.mulf %19, %21 : vector<16x32xf32>
    %23 = vector.extract_strided_slice %4 {offsets = [1, 0], sizes = [1, 32], strides = [1, 1]} : vector<3x32xf32> to vector<1x32xf32>
    %24 = vector.broadcast %23 : vector<1x32xf32> to vector<16x32xf32>
    %25 = arith.addf %22, %24 : vector<16x32xf32>
    %cst_11 = arith.constant 0.000000e+00 : f32
    %26 = vector.broadcast %cst_11 : f32 to vector<16x32xf32>
    %27 = arith.cmpf ogt, %25, %26 : vector<16x32xf32>
    %28 = vector.extract_strided_slice %4 {offsets = [2, 0], sizes = [1, 32], strides = [1, 1]} : vector<3x32xf32> to vector<1x32xf32>
    %29 = vector.broadcast %28 : vector<1x32xf32> to vector<16x32xf32>
    %30 = arith.mulf %25, %29 : vector<16x32xf32>
    %31 = arith.select %27, %25, %30 : vector<16x32xi1>, vector<16x32xf32>
    %32 = arith.truncf %31 : vector<16x32xf32> to vector<16x32xbf16>
    %c0_12 = arith.constant 0 : index
    %c0_13 = arith.constant 0 : index
    %33 = vector.load %arg6[%c0_12, %c0_13] : memref<16x32xbf16, #tpu.memory_space<vmem>>, vector<16x32xbf16>
    tpu.vector_store %arg6[%c0_12, %c0_13], %32 {strides = array<i32>} : memref<16x32xbf16, #tpu.memory_space<vmem>>, vector<16x32xbf16>,
    return
  }
  func.func @transform_0(%arg0: i32) -> (i32, i32) {
    %c0_i32 = arith.constant 0 : i32
    %c0_i32_0 = arith.constant 0 : i32
    return %arg0, %c0_i32 : i32, i32
  }
  func.func @transform_1(%arg0: i32) -> (i32, i32) {
    %c0_i32 = arith.constant 0 : i32
    %c0_i32_0 = arith.constant 0 : i32
    %c0_i32_1 = arith.constant 0 : i32
    return %c0_i32, %c0_i32_0 : i32, i32
  }
  func.func @transform_2(%arg0: i32) -> (i32, i32) {
    %c0_i32 = arith.constant 0 : i32
    %c0_i32_0 = arith.constant 0 : i32
    %c0_i32_1 = arith.constant 0 : i32
    return %c0_i32, %c0_i32_0 : i32, i32
  }
  func.func @transform_3(%arg0: i32) -> (i32, i32) {
    %c0_i32 = arith.constant 0 : i32
    %c0_i32_0 = arith.constant 0 : i32
    %c0_i32_1 = arith.constant 0 : i32
    return %c0_i32, %c0_i32_0 : i32, i32
  }
  func.func @transform_4(%arg0: i32) -> (i32, i32) {
    %c0_i32 = arith.constant 0 : i32
    %c0_i32_0 = arith.constant 0 : i32
    %c0_i32_1 = arith.constant 0 : i32
    return %c0_i32, %c0_i32_0 : i32, i32
  }
  func.func @transform_5(%arg0: i32) -> (i32, i32) {
    %c0_i32 = arith.constant 0 : i32
    %c0_i32_0 = arith.constant 0 : i32
    return %arg0, %c0_i32 : i32, i32
  }
}

module attributes {stable_mosaic.version = 11 : i64} {
  func.func @_sep_se_res_kernel(%arg0: i32, %arg1: memref<1x16x144xbf16, #tpu.memory_space<vmem>>, %arg2: memref<1x16x16xbf16, #tpu.memory_space<vmem>>, %arg3: memref<144x16xbf16, #tpu.memory_space<vmem>>, %arg4: memref<3x16xf32, #tpu.memory_space<vmem>>, %arg5: memref<16x16xbf16, #tpu.memory_space<vmem>>, %arg6: memref<3x16xf32, #tpu.memory_space<vmem>>, %arg7: memref<16x4xf32, #tpu.memory_space<vmem>>, %arg8: memref<2x4xf32, #tpu.memory_space<vmem>>, %arg9: memref<4x16xf32, #tpu.memory_space<vmem>>, %arg10: memref<1x16xf32, #tpu.memory_space<vmem>>, %arg11: memref<1x16xf32, #tpu.memory_space<vmem>>, %arg12: memref<1x16x16xf32, #tpu.memory_space<vmem>>) attributes {dimension_semantics = [#tpu.dimension_semantics<parallel>], iteration_bounds = array<i64: 2>, scalar_prefetch = 0 : i64, scratch_operands = 0 : i64, tpu.core_type = #tpu.core_type<tc>, window_params = [{transform_indices = @transform_0, window_bounds = array<i64: 1, 16, 144>}, {transform_indices = @transform_1, window_bounds = array<i64: 1, 16, 16>}, {pipeline_mode = #tpu.pipeline_mode<synchronous>, transform_indices = @transform_2, window_bounds = array<i64: 144, 16>}, {pipeline_mode = #tpu.pipeline_mode<synchronous>, transform_indices = @transform_3, window_bounds = array<i64: 3, 16>}, {pipeline_mode = #tpu.pipeline_mode<synchronous>, transform_indices = @transform_4, window_bounds = array<i64: 16, 16>}, {pipeline_mode = #tpu.pipeline_mode<synchronous>, transform_indices = @transform_5, window_bounds = array<i64: 3, 16>}, {pipeline_mode = #tpu.pipeline_mode<synchronous>, transform_indices = @transform_6, window_bounds = array<i64: 16, 4>}, {pipeline_mode = #tpu.pipeline_mode<synchronous>, transform_indices = @transform_7, window_bounds = array<i64: 2, 4>}, {pipeline_mode = #tpu.pipeline_mode<synchronous>, transform_indices = @transform_8, window_bounds = array<i64: 4, 16>}, {pipeline_mode = #tpu.pipeline_mode<synchronous>, transform_indices = @transform_9, window_bounds = array<i64: 1, 16>}, {pipeline_mode = #tpu.pipeline_mode<synchronous>, transform_indices = @transform_10, window_bounds = array<i64: 1, 16>}, {transform_indices = @transform_11, window_bounds = array<i64: 1, 16, 16>}]} {
    %c0 = arith.constant 0 : index
    %c0_0 = arith.constant 0 : index
    %c0_1 = arith.constant 0 : index
    %0 = vector.load %arg1[%c0, %c0_0, %c0_1] : memref<1x16x144xbf16, #tpu.memory_space<vmem>>, vector<1x16x144xbf16>
    %1 = vector.shape_cast %0 : vector<1x16x144xbf16> to vector<16x144xbf16>
    %c0_2 = arith.constant 0 : index
    %c0_3 = arith.constant 0 : index
    %2 = vector.load %arg3[%c0_2, %c0_3] : memref<144x16xbf16, #tpu.memory_space<vmem>>, vector<144x16xbf16>
    %c0_4 = arith.constant 0 : index
    %c0_5 = arith.constant 0 : index
    %3 = vector.load %arg4[%c0_4, %c0_5] : memref<3x16xf32, #tpu.memory_space<vmem>>, vector<3x16xf32>
    %c0_6 = arith.constant 0 : index
    %c0_7 = arith.constant 0 : index
    %4 = vector.load %arg5[%c0_6, %c0_7] : memref<16x16xbf16, #tpu.memory_space<vmem>>, vector<16x16xbf16>
    %c0_8 = arith.constant 0 : index
    %c0_9 = arith.constant 0 : index
    %5 = vector.load %arg6[%c0_8, %c0_9] : memref<3x16xf32, #tpu.memory_space<vmem>>, vector<3x16xf32>
    %cst = arith.constant dense<0.000000e+00> : vector<16x16xf32>
    %6 = tpu.matmul %1, %2, %cst {dimension_numbers = #tpu.dot_dimension_numbers<[1], [0], [0], [1], [0, 0, 1, 1], [], []>} : vector<16x144xbf16>, vector<144x16xbf16>, vector<16x16xf32> -> vector<16x16xf32>
    %7 = vector.extract_strided_slice %3 {offsets = [0, 0], sizes = [1, 16], strides = [1, 1]} : vector<3x16xf32> to vector<1x16xf32>
    %8 = vector.broadcast %7 : vector<1x16xf32> to vector<16x16xf32>
    %9 = arith.mulf %6, %8 : vector<16x16xf32>
    %10 = vector.extract_strided_slice %3 {offsets = [1, 0], sizes = [1, 16], strides = [1, 1]} : vector<3x16xf32> to vector<1x16xf32>
    %11 = vector.broadcast %10 : vector<1x16xf32> to vector<16x16xf32>
    %12 = arith.addf %9, %11 : vector<16x16xf32>
    %cst_10 = arith.constant 0.000000e+00 : f32
    %13 = vector.broadcast %cst_10 : f32 to vector<16x16xf32>
    %14 = arith.cmpf ogt, %12, %13 : vector<16x16xf32>
    %15 = vector.extract_strided_slice %3 {offsets = [2, 0], sizes = [1, 16], strides = [1, 1]} : vector<3x16xf32> to vector<1x16xf32>
    %16 = vector.broadcast %15 : vector<1x16xf32> to vector<16x16xf32>
    %17 = arith.mulf %12, %16 : vector<16x16xf32>
    %18 = arith.select %14, %12, %17 : vector<16x16xi1>, vector<16x16xf32>
    %19 = arith.truncf %18 : vector<16x16xf32> to vector<16x16xbf16>
    %cst_11 = arith.constant dense<0.000000e+00> : vector<16x16xf32>
    %20 = tpu.matmul %19, %4, %cst_11 {dimension_numbers = #tpu.dot_dimension_numbers<[1], [0], [0], [1], [0, 0, 1, 1], [], []>} : vector<16x16xbf16>, vector<16x16xbf16>, vector<16x16xf32> -> vector<16x16xf32>
    %21 = vector.extract_strided_slice %5 {offsets = [0, 0], sizes = [1, 16], strides = [1, 1]} : vector<3x16xf32> to vector<1x16xf32>
    %22 = vector.broadcast %21 : vector<1x16xf32> to vector<16x16xf32>
    %23 = arith.mulf %20, %22 : vector<16x16xf32>
    %24 = vector.extract_strided_slice %5 {offsets = [1, 0], sizes = [1, 16], strides = [1, 1]} : vector<3x16xf32> to vector<1x16xf32>
    %25 = vector.broadcast %24 : vector<1x16xf32> to vector<16x16xf32>
    %26 = arith.addf %23, %25 : vector<16x16xf32>
    %cst_12 = arith.constant 0.000000e+00 : f32
    %27 = vector.broadcast %cst_12 : f32 to vector<16x16xf32>
    %28 = arith.cmpf ogt, %26, %27 : vector<16x16xf32>
    %29 = vector.extract_strided_slice %5 {offsets = [2, 0], sizes = [1, 16], strides = [1, 1]} : vector<3x16xf32> to vector<1x16xf32>
    %30 = vector.broadcast %29 : vector<1x16xf32> to vector<16x16xf32>
    %31 = arith.mulf %26, %30 : vector<16x16xf32>
    %32 = arith.select %28, %26, %31 : vector<16x16xi1>, vector<16x16xf32>
    %cst_13 = arith.constant dense<0.000000e+00> : vector<16xf32>
    %33 = vector.multi_reduction <add>, %32, %cst_13 [0] : vector<16x16xf32> to vector<16xf32>
    %34 = vector.shape_cast %33 : vector<16xf32> to vector<1x16xf32>
    %cst_14 = arith.constant 6.250000e-02 : f32
    %35 = vector.broadcast %cst_14 : f32 to vector<1x16xf32>
    %36 = arith.mulf %34, %35 : vector<1x16xf32>
    %c0_15 = arith.constant 0 : index
    %c0_16 = arith.constant 0 : index
    %37 = vector.load %arg7[%c0_15, %c0_16] : memref<16x4xf32, #tpu.memory_space<vmem>>, vector<16x4xf32>
    %cst_17 = arith.constant dense<0.000000e+00> : vector<1x4xf32>
    %38 = tpu.matmul %36, %37, %cst_17 {dimension_numbers = #tpu.dot_dimension_numbers<[1], [0], [0], [1], [0, 0, 1, 1], [], []>} : vector<1x16xf32>, vector<16x4xf32>, vector<1x4xf32> -> vector<1x4xf32>
    %c0_18 = arith.constant 0 : index
    %c0_19 = arith.constant 0 : index
    %39 = vector.load %arg8[%c0_18, %c0_19] : memref<2x4xf32, #tpu.memory_space<vmem>>, vector<1x4xf32>
    %40 = arith.addf %38, %39 : vector<1x4xf32>
    %cst_20 = arith.constant 0.000000e+00 : f32
    %41 = vector.broadcast %cst_20 : f32 to vector<1x4xf32>
    %42 = arith.cmpf ogt, %40, %41 : vector<1x4xf32>
    %c1 = arith.constant 1 : index
    %c0_21 = arith.constant 0 : index
    %43 = vector.load %arg8[%c1, %c0_21] : memref<2x4xf32, #tpu.memory_space<vmem>>, vector<1x4xf32>
    %44 = arith.mulf %40, %43 : vector<1x4xf32>
    %45 = arith.select %42, %40, %44 : vector<1x4xi1>, vector<1x4xf32>
    %c0_22 = arith.constant 0 : index
    %c0_23 = arith.constant 0 : index
    %46 = vector.load %arg9[%c0_22, %c0_23] : memref<4x16xf32, #tpu.memory_space<vmem>>, vector<4x16xf32>
    %cst_24 = arith.constant dense<0.000000e+00> : vector<1x16xf32>
    %47 = tpu.matmul %45, %46, %cst_24 {dimension_numbers = #tpu.dot_dimension_numbers<[1], [0], [0], [1], [0, 0, 1, 1], [], []>} : vector<1x4xf32>, vector<4x16xf32>, vector<1x16xf32> -> vector<1x16xf32>
    %c0_25 = arith.constant 0 : index
    %c0_26 = arith.constant 0 : index
    %48 = vector.load %arg10[%c0_25, %c0_26] : memref<1x16xf32, #tpu.memory_space<vmem>>, vector<1x16xf32>
    %49 = arith.addf %47, %48 : vector<1x16xf32>
    %50 = arith.negf %49 : vector<1x16xf32>
    %51 = math.exp %50 : vector<1x16xf32>
    %cst_27 = arith.constant 1.000000e+00 : f32
    %52 = vector.broadcast %cst_27 : f32 to vector<1x16xf32>
    %53 = arith.addf %52, %51 : vector<1x16xf32>
    %54 = arith.divf %52, %53 : vector<1x16xf32>
    %55 = vector.broadcast %54 : vector<1x16xf32> to vector<16x16xf32>
    %56 = arith.mulf %32, %55 : vector<16x16xf32>
    %c0_28 = arith.constant 0 : index
    %c0_29 = arith.constant 0 : index
    %c0_30 = arith.constant 0 : index
    %57 = vector.load %arg2[%c0_28, %c0_29, %c0_30] : memref<1x16x16xbf16, #tpu.memory_space<vmem>>, vector<1x16x16xbf16>
    %58 = vector.shape_cast %57 : vector<1x16x16xbf16> to vector<16x16xbf16>
    %59 = arith.extf %58 : vector<16x16xbf16> to vector<16x16xf32>
    %60 = arith.addf %56, %59 : vector<16x16xf32>
    %cst_31 = arith.constant 0.000000e+00 : f32
    %61 = vector.broadcast %cst_31 : f32 to vector<16x16xf32>
    %62 = arith.cmpf ogt, %60, %61 : vector<16x16xf32>
    %c0_32 = arith.constant 0 : index
    %c0_33 = arith.constant 0 : index
    %63 = vector.load %arg11[%c0_32, %c0_33] : memref<1x16xf32, #tpu.memory_space<vmem>>, vector<1x16xf32>
    %64 = vector.broadcast %63 : vector<1x16xf32> to vector<16x16xf32>
    %65 = arith.mulf %60, %64 : vector<16x16xf32>
    %66 = arith.select %62, %60, %65 : vector<16x16xi1>, vector<16x16xf32>
    %c0_34 = arith.constant 0 : index
    %c0_35 = arith.constant 0 : index
    %c0_36 = arith.constant 0 : index
    %67 = vector.load %arg12[%c0_34, %c0_35, %c0_36] : memref<1x16x16xf32, #tpu.memory_space<vmem>>, vector<1x16x16xf32>
    %68 = vector.shape_cast %67 : vector<1x16x16xf32> to vector<16x16xf32>
    %69 = vector.shape_cast %66 : vector<16x16xf32> to vector<1x16x16xf32>
    tpu.vector_store %arg12[%c0_34, %c0_35, %c0_36], %69 {strides = array<i32>} : memref<1x16x16xf32, #tpu.memory_space<vmem>>, vector<1x16x16xf32>,
    return
  }
  func.func @transform_0(%arg0: i32) -> (i32, i32, i32) {
    %c0_i32 = arith.constant 0 : i32
    %c0_i32_0 = arith.constant 0 : i32
    %c0_i32_1 = arith.constant 0 : i32
    return %arg0, %c0_i32, %c0_i32_0 : i32, i32, i32
  }
  func.func @transform_1(%arg0: i32) -> (i32, i32, i32) {
    %c0_i32 = arith.constant 0 : i32
    %c0_i32_0 = arith.constant 0 : i32
    %c0_i32_1 = arith.constant 0 : i32
    return %arg0, %c0_i32, %c0_i32_0 : i32, i32, i32
  }
  func.func @transform_2(%arg0: i32) -> (i32, i32) {
    %c0_i32 = arith.constant 0 : i32
    %c0_i32_0 = arith.constant 0 : i32
    %c0_i32_1 = arith.constant 0 : i32
    return %c0_i32, %c0_i32_0 : i32, i32
  }
  func.func @transform_3(%arg0: i32) -> (i32, i32) {
    %c0_i32 = arith.constant 0 : i32
    %c0_i32_0 = arith.constant 0 : i32
    %c0_i32_1 = arith.constant 0 : i32
    return %c0_i32, %c0_i32_0 : i32, i32
  }
  func.func @transform_4(%arg0: i32) -> (i32, i32) {
    %c0_i32 = arith.constant 0 : i32
    %c0_i32_0 = arith.constant 0 : i32
    %c0_i32_1 = arith.constant 0 : i32
    return %c0_i32, %c0_i32_0 : i32, i32
  }
  func.func @transform_5(%arg0: i32) -> (i32, i32) {
    %c0_i32 = arith.constant 0 : i32
    %c0_i32_0 = arith.constant 0 : i32
    %c0_i32_1 = arith.constant 0 : i32
    return %c0_i32, %c0_i32_0 : i32, i32
  }
  func.func @transform_6(%arg0: i32) -> (i32, i32) {
    %c0_i32 = arith.constant 0 : i32
    %c0_i32_0 = arith.constant 0 : i32
    %c0_i32_1 = arith.constant 0 : i32
    return %c0_i32, %c0_i32_0 : i32, i32
  }
  func.func @transform_7(%arg0: i32) -> (i32, i32) {
    %c0_i32 = arith.constant 0 : i32
    %c0_i32_0 = arith.constant 0 : i32
    %c0_i32_1 = arith.constant 0 : i32
    return %c0_i32, %c0_i32_0 : i32, i32
  }
  func.func @transform_8(%arg0: i32) -> (i32, i32) {
    %c0_i32 = arith.constant 0 : i32
    %c0_i32_0 = arith.constant 0 : i32
    %c0_i32_1 = arith.constant 0 : i32
    return %c0_i32, %c0_i32_0 : i32, i32
  }
  func.func @transform_9(%arg0: i32) -> (i32, i32) {
    %c0_i32 = arith.constant 0 : i32
    %c0_i32_0 = arith.constant 0 : i32
    %c0_i32_1 = arith.constant 0 : i32
    return %c0_i32, %c0_i32_0 : i32, i32
  }
  func.func @transform_10(%arg0: i32) -> (i32, i32) {
    %c0_i32 = arith.constant 0 : i32
    %c0_i32_0 = arith.constant 0 : i32
    %c0_i32_1 = arith.constant 0 : i32
    return %c0_i32, %c0_i32_0 : i32, i32
  }
  func.func @transform_11(%arg0: i32) -> (i32, i32, i32) {
    %c0_i32 = arith.constant 0 : i32
    %c0_i32_0 = arith.constant 0 : i32
    %c0_i32_1 = arith.constant 0 : i32
    return %arg0, %c0_i32, %c0_i32_0 : i32, i32, i32
  }
}

</mosaic_0001>

<llo_original>
// kernel: head_block_forward.3
$region0: #{head_block_forward.3}
  #allocation0 [shape = 'u32[]', space=smem, size = 0x4, offset = 0x4, fixed_abs, tag = 'smem constant byte address 0x4 - core index']
  #allocation1 [shape = 'u32[144,128]{1,0:T(1,128)}', space=vmem, size = 0x12000, scoped, tag = 'internal scratch']
  %s0 = inlined_call_operand.vmem [shape: bf16[128,27], index: 0, kind: input, shape index: {}]
  %s1 = inlined_call_operand.vmem [shape: bf16[27,16], index: 1, kind: input, shape index: {}]
  %s2 = inlined_call_operand.vmem [shape: f32[3,16], index: 2, kind: input, shape index: {}]
  %s3 = inlined_call_operand.vmem [shape: bf16[128,16], index: 3, kind: output, shape index: {}]
  %s4 = sld [smem:[#allocation0]]
  $region45: #{head_block_forward.3} parent=0
    _
  %s6 = ssub.s32 1, %s4
  %s7 = scalar_select 0, %s6, %s4
  loop: start=0, step=1, limit=4
  $region2: #{head_block_forward.3} parent=0 // loop_pre_header
    _
  $region3: #{head_block_forward.3} parent=0 // loop_header
    %s9 = sphi 0, %s13
    %p10 = scmp.ge.s32.totalorder %s9, 4
    %s19 = sphi 0, %s21
    %s22 = sphi 0, %s19
    %s23 = sphi 0, %s22
    %s39 = sphi 0, %s23
    %s43 = sphi 0, %s43
    %s45 = sphi 0, %s43
    %s46 = sphi 0, %s45
    %s60 = sphi 0, %s46
    %s64 = sphi 0, %s64
    %s66 = sphi 0, %s64
    %s67 = sphi 0, %s66
    %s81 = sphi 0, %s67
    %s87 = sphi 0, %s89
    %s90 = sphi 0, %s87
    %s91 = sphi 0, %s90
    %s107 = sphi 0, %s91
  $region4: #{head_block_forward.3} parent=0 // loop_header_branch
    %12 = sbr.rel (%p10) target = $region8
  $region5: #{head_block_forward.3} parent=0 // loop_body
    %s14 = ssub.s32 %s9, 1
    %s15 = ssub.s32 %s9, 2
    %s16 = sadd.s32 %s9, 1
    %s17 = ssub.s32 %s9, %s16
    %p18 = scmp.eq.s32.totalorder %s17, 0
    %s20 = sadd.s32 %s19, 1
    %s21 = scalar_select %p18, %s19, %s20
    %p24 = pneg %p18
    %p25 = scmp.eq.s32.totalorder %s9, 1
    %p26 = por %p24, %p25
    %p27 = scmp.ne.s32.totalorder %s19, %s22
    %p28 = scmp.eq.s32.totalorder %s9, 0
    %p29 = por %p27, %p28
    %p30 = scmp.ne.s32.totalorder %s19, %s22
    %p31 = scmp.eq.s32.totalorder %s14, 1
    %p32 = por %p30, %p31
    %p33 = scmp.ne.s32.totalorder %s22, %s23
    %p34 = scmp.eq.s32.totalorder %s14, 0
    %p35 = por %p33, %p34
    %p36 = scmp.ne.s32.totalorder %s22, %s23
    %p37 = scmp.eq.s32.totalorder %s15, 1
    %p38 = por %p36, %p37
    %p40 = scmp.ne.s32.totalorder %s23, %s39
    %p41 = scmp.eq.s32.totalorder %s15, 0
    %p42 = por %p40, %p41
    %s44 = sadd.s32 %s43, 1
    %p47 = scmp.eq.s32.totalorder %s9, 1
    %p48 = scmp.ne.s32.totalorder %s43, %s45
    %p49 = scmp.eq.s32.totalorder %s9, 0
    %p50 = por %p48, %p49
    %p51 = scmp.ne.s32.totalorder %s43, %s45
    %p52 = scmp.eq.s32.totalorder %s14, 1
    %p53 = por %p51, %p52
    %p54 = scmp.ne.s32.totalorder %s45, %s46
    %p55 = scmp.eq.s32.totalorder %s14, 0
    %p56 = por %p54, %p55
    %p57 = scmp.ne.s32.totalorder %s45, %s46
    %p58 = scmp.eq.s32.totalorder %s15, 1
    %p59 = por %p57, %p58
    %p61 = scmp.ne.s32.totalorder %s46, %s60
    %p62 = scmp.eq.s32.totalorder %s15, 0
    %p63 = por %p61, %p62
    %s65 = sadd.s32 %s64, 1
    %p68 = scmp.eq.s32.totalorder %s9, 1
    %p69 = scmp.ne.s32.totalorder %s64, %s66
    %p70 = scmp.eq.s32.totalorder %s9, 0
    %p71 = por %p69, %p70
    %p72 = scmp.ne.s32.totalorder %s64, %s66
    %p73 = scmp.eq.s32.totalorder %s14, 1
    %p74 = por %p72, %p73
    %p75 = scmp.ne.s32.totalorder %s66, %s67
    %p76 = scmp.eq.s32.totalorder %s14, 0
    %p77 = por %p75, %p76
    %p78 = scmp.ne.s32.totalorder %s66, %s67
    %p79 = scmp.eq.s32.totalorder %s15, 1
    %p80 = por %p78, %p79
    %p82 = scmp.ne.s32.totalorder %s67, %s81
    %p83 = scmp.eq.s32.totalorder %s15, 0
    %p84 = por %p82, %p83
    %s85 = ssub.s32 %s9, %s16
    %p86 = scmp.eq.s32.totalorder %s85, 0
    %s88 = sadd.s32 %s87, 1
    %s89 = scalar_select %p86, %s87, %s88
    %p92 = pneg %p86
    %p93 = scmp.eq.s32.totalorder %s9, 1
    %p94 = por %p92, %p93
    %p95 = scmp.ne.s32.totalorder %s87, %s90
    %p96 = scmp.eq.s32.totalorder %s9, 0
    %p97 = por %p95, %p96
    %p98 = scmp.ne.s32.totalorder %s87, %s90
    %p99 = scmp.eq.s32.totalorder %s14, 1
    %p100 = por %p98, %p99
    %p101 = scmp.ne.s32.totalorder %s90, %s91
    %p102 = scmp.eq.s32.totalorder %s14, 0
    %p103 = por %p101, %p102
    %p104 = scmp.ne.s32.totalorder %s90, %s91
    %p105 = scmp.eq.s32.totalorder %s15, 1
    %p106 = por %p104, %p105
    %p108 = scmp.ne.s32.totalorder %s91, %s107
    %p109 = scmp.eq.s32.totalorder %s15, 0
    %p110 = por %p108, %p109
    %p111 = scmp.le.s32.totalorder 1, %s9
    %p112 = scmp.lt.s32.totalorder %s9, 3
    %p113 = pnand %p111, %p112
    %p114 = pneg %p113
    // Predicated region
    $region9: #{head_block_forward.3} parent=5 // pred_check
      _
    $region10: #{head_block_forward.3} parent=5 // pred_check_branch
      %116 = sbr.rel (%p113) target = $region12
    $region11: #{head_block_forward.3} parent=5 // pred_region
      %s117 = ssub.s32 %s9, 1
      // Predicated region
      $region13: #{head_block_forward.3} parent=11 // pred_check
        %p118 = pneg %p56
      $region14: #{head_block_forward.3} parent=11 // pred_check_branch
        %120 = sbr.rel (%p118) target = $region16
      $region15: #{head_block_forward.3} parent=11 // pred_region
        _
      $region16: #{head_block_forward.3} parent=11 // pred_fallthru
        _
      // Predicated region
      $region17: #{head_block_forward.3} parent=11 // pred_check
        %p121 = pneg %p77
      $region18: #{head_block_forward.3} parent=11 // pred_check_branch
        %123 = sbr.rel (%p121) target = $region20
      $region19: #{head_block_forward.3} parent=11 // pred_region
        _
      $region20: #{head_block_forward.3} parent=11 // pred_fallthru
        _
    $region12: #{head_block_forward.3} parent=5 // pred_fallthru
      _
    %p124 = scmp.lt.s32.totalorder %s9, 2
    // Predicated region
    $region21: #{head_block_forward.3} parent=5 // pred_check
      %p125 = pneg %p124
    $region22: #{head_block_forward.3} parent=5 // pred_check_branch
      %127 = sbr.rel (%p125) target = $region24
    $region23: #{head_block_forward.3} parent=5 // pred_region
      // Predicated region
      $region25: #{head_block_forward.3} parent=23 // pred_check
        %p128 = pneg %p29
      $region26: #{head_block_forward.3} parent=23 // pred_check_branch
        %130 = sbr.rel (%p128) target = $region28
      $region27: #{head_block_forward.3} parent=23 // pred_region
        %s131 = smul.u32 8, %s9
        %p132 = scmp.lt.s32.totalorder %s131, 15
        %s133 = scalar_select %p132, %s131, 15
        %s134 = smul.addr %s133, 4
        %s135 = scalar_lea.vmem %s0, %s134
        %s136 = smul.u32 8, %s9
      $region28: #{head_block_forward.3} parent=23 // pred_fallthru
        _
    $region24: #{head_block_forward.3} parent=5 // pred_fallthru
      _
    %p137 = scmp.le.s32.totalorder 1, %s9
    %p138 = scmp.lt.s32.totalorder %s9, 3
    %p139 = pnand %p137, %p138
    %p140 = pneg %p139
    // Predicated region
    $region29: #{head_block_forward.3} parent=5 // pred_check
      _
    $region30: #{head_block_forward.3} parent=5 // pred_check_branch
      %142 = sbr.rel (%p139) target = $region32
    $region31: #{head_block_forward.3} parent=5 // pred_region
      %s143 = ssub.s32 %s9, 1
      %s144 = smul.u32 8, %s14
      %p145 = scmp.lt.s32.totalorder %s144, 15
      %s146 = scalar_select %p145, %s144, 15
      %s147 = smul.addr %s146, 4
      %s148 = scalar_lea.vmem %s0, %s147
      %p149 = pneg %p35
      %p150 = pneg %p32
      %p151 = pneg %p56
      %p152 = pneg %p53
      %p153 = pneg %p77
      %p154 = pneg %p74
      %p155 = pneg %p103
      %p156 = pneg %p100
      %s157 = smul.u32 8, %s14
      %p158 = scmp.lt.s32.totalorder %s157, 15
      %s159 = scalar_select %p158, %s157, 15
      %s160 = smul.addr %s159, 4
      %s161 = scalar_lea.vmem %s3, %s160
      %s162 = smul.u32 8, %s14
      %p163 = scmp.lt.s32.totalorder %s162, 15
      %s164 = scalar_select %p163, %s162, 15
      %s165 = smul.addr %s164, 4
      %s166 = scalar_lea.vmem %s0, %s165
      %s167 = smul.u32 8, %s14
      %s168 = smul.u32 8, %s14
      %p169 = scmp.lt.s32.totalorder %s168, 15
      %s170 = scalar_select %p169, %s168, 15
      %s171 = smul.addr %s170, 4
      %s172 = scalar_lea.vmem %s3, %s171
      %s173 = smul.u32 8, %s14
      %v175 = vld [vmem:[%s166] sm:$0xf]
      %v176 = vld [vmem:[%s166 + $0x4] sm:$0xf]
      %v177 = vld [vmem:[%s166 + $0x8] sm:$0xf]
      %v178 = vld [vmem:[%s166 + $0xc] sm:$0xf]
      %v179 = vld [vmem:[%s166 + $0x10] sm:$0xf]
      %v180 = vld [vmem:[%s166 + $0x14] sm:$0xf]
      %v181 = vld [vmem:[%s166 + $0x18] sm:$0xf]
      %v182 = vld [vmem:[%s166 + $0x1c] sm:$0xf]
      %v183 = vld [vmem:[%s1] sm:$0xf]
      %v184 = vld [vmem:[%s1 + $0x4] sm:$0xf]
      %v185 = vld [vmem:[%s1 + $0x8] sm:$0xf]
      %v186 = vld [vmem:[%s1 + $0xc] sm:$0x3]
      %v195 = vunpack.c.l.b16 %v175
      %v196 = vunpack.c.l.b16 %v176
      %v197 = vunpack.c.l.b16 %v177
      %v198 = vunpack.c.l.b16 %v178
      %v199 = vunpack.c.l.b16 %v179
      %v200 = vunpack.c.l.b16 %v180
      %v201 = vunpack.c.l.b16 %v181
      %v202 = vunpack.c.l.b16 %v182
      %v203 = vpack.c.b16 %v196, %v195
      %v204 = vpack.c.b16 %v198, %v197
      %v205 = vpack.c.b16 %v200, %v199
      %v206 = vpack.c.b16 %v202, %v201
      %v211 = vunpack.c.l.b16 %v183
      %v212 = vunpack.c.l.b16 %v184
      %v213 = vunpack.c.l.b16 %v185
      %v214 = vunpack.c.l.b16 %v186
      %v215 = vpack.c.b16 %v212, %v211
      %v216 = vpack.c.b16 %v214, %v213
      %vm218 = vcmask 220160
      %v220 = vsel %vm218, %v203, 0
      %v223 = vsel %vm218, %v204, 0
      %v226 = vsel %vm218, %v205, 0
      %v229 = vsel %vm218, %v206, 0
      %vm231 = vcmask 1044480
      %vm232 = vcmask 1045504
      %v233 = vsel %vm231, 4294967295, 65535
      %v234 = vsel %vm232, %v233, 0
      %v236 = vand.u32 %v216, %v234
      %238 = vmatprep.subr.bf16.mxu0 0
      %239 = vmatpush1.bf16.msra.mxu0 0
      %240 = vmatprep.subr.bf16.mxu0 0
      %241 = vmatpush1.bf16.msra.mxu0 0
      %242 = vmatprep.subr.bf16.mxu0 0
      %243 = vmatpush1.bf16.msra.mxu0 0
      %244 = vmatprep.subr.bf16.mxu0 0
      %245 = vmatpush1.bf16.msra.mxu0 0
      %246 = vmatprep.subr.bf16.mxu0 0
      %247 = vmatpush1.bf16.msra.mxu0 0
      %248 = vmatprep.subr.bf16.mxu0 0
      %249 = vmatpush1.bf16.msra.mxu0 0
      %250 = vmatprep.subr.bf16.mxu0 0
      %251 = vmatpush1.bf16.msra.mxu0 %v236
      %252 = vmatprep.subr.bf16.mxu0 0
      %253 = vmatpush1.bf16.msra.mxu0 %v215
      %254 = vmatprep.subr.bf16.mxu0 0
      %255 = vmatpush2.bf16.msra.mxu0 0
      %256 = vmatprep.subr.bf16.mxu0 0
      %257 = vmatpush2.bf16.msra.mxu0 0
      %258 = vmatprep.subr.bf16.mxu0 0
      %259 = vmatpush2.bf16.msra.mxu0 0
      %260 = vmatprep.subr.bf16.mxu0 0
      %261 = vmatpush2.bf16.msra.mxu0 0
      %262 = vmatprep.subr.bf16.mxu0 0
      %263 = vmatpush2.bf16.msra.mxu0 0
      %264 = vmatprep.subr.bf16.mxu0 0
      %265 = vmatpush2.bf16.msra.mxu0 0
      %266 = vmatprep.subr.bf16.mxu0 0
      %267 = vmatpush2.bf16.msra.mxu0 0
      %268 = vmatprep.subr.bf16.mxu0 0
      %269 = vmatpush2.bf16.msra.mxu0 0
      %270 = vmatprep.mubr.bf16.mxu0 0
      %271 = vmatmul.mubr.bf16.gmra.mxu0 %v220
      %v272 = vpop.f32.mrf.mxu0
      %v273 = vadd.f32 0.0, %v272
      %v274 = vpop.f32.mrf.mxu0
      %v275 = vpop.f32.mrf.mxu0
      %v276 = vadd.f32 0.0, %v275
      %v277 = vpop.f32.mrf.mxu0
      %278 = vmatprep.mubr.bf16.mxu0 0
      %279 = vmatmul.mubr.bf16.gmra.mxu0 %v223
      %v280 = vpop.f32.mrf.mxu0
      %v281 = vadd.f32 0.0, %v280
      %v282 = vpop.f32.mrf.mxu0
      %v283 = vpop.f32.mrf.mxu0
      %v284 = vadd.f32 0.0, %v283
      %v285 = vpop.f32.mrf.mxu0
      %286 = vmatprep.mubr.bf16.mxu0 0
      %287 = vmatmul.mubr.bf16.gmra.mxu0 %v226
      %v288 = vpop.f32.mrf.mxu0
      %v289 = vadd.f32 0.0, %v288
      %v290 = vpop.f32.mrf.mxu0
      %v291 = vpop.f32.mrf.mxu0
      %v292 = vadd.f32 0.0, %v291
      %v293 = vpop.f32.mrf.mxu0
      %294 = vmatprep.mubr.bf16.mxu0 0
      %295 = vmatmul.mubr.bf16.gmra.mxu0 %v229
      %v296 = vpop.f32.mrf.mxu0
      %v297 = vadd.f32 0.0, %v296
      %v298 = vpop.f32.mrf.mxu0
      %v299 = vpop.f32.mrf.mxu0
      %v300 = vadd.f32 0.0, %v299
      %v301 = vpop.f32.mrf.mxu0
      %302 = vdwg.mxu0
      %v303 = vld [vmem:[%s2] sm:$0x7]
      %v304 = vlaneseq
      %v305 = vshrl.u32 %v304, 7
      %v306 = vsub.s32 0, %v305
      %v307 = vrot.slane %v303, %v306
      %v308 = vmul.f32 %v273, %v307
      %v309 = vmul.f32 %v276, %v307
      %v310 = vmul.f32 %v281, %v307
      %v311 = vmul.f32 %v284, %v307
      %v312 = vmul.f32 %v289, %v307
      %v313 = vmul.f32 %v292, %v307
      %v314 = vmul.f32 %v297, %v307
      %v315 = vmul.f32 %v300, %v307
      %v316 = vlaneseq
      %v317 = vshrl.u32 %v316, 7
      %v318 = vsub.s32 1, %v317
      %v319 = vrot.slane %v303, %v318
      %v320 = vadd.f32 %v308, %v319
      %v321 = vadd.f32 %v309, %v319
      %v322 = vadd.f32 %v310, %v319
      %v323 = vadd.f32 %v311, %v319
      %v324 = vadd.f32 %v312, %v319
      %v325 = vadd.f32 %v313, %v319
      %v326 = vadd.f32 %v314, %v319
      %v327 = vadd.f32 %v315, %v319
      %vm328 = vcmp.gt.f32.partialorder %v320, 0.0
      %vm329 = vcmp.gt.f32.partialorder %v321, 0.0
      %vm330 = vcmp.gt.f32.partialorder %v322, 0.0
      %vm331 = vcmp.gt.f32.partialorder %v323, 0.0
      %vm332 = vcmp.gt.f32.partialorder %v324, 0.0
      %vm333 = vcmp.gt.f32.partialorder %v325, 0.0
      %vm334 = vcmp.gt.f32.partialorder %v326, 0.0
      %vm335 = vcmp.gt.f32.partialorder %v327, 0.0
      %v336 = vlaneseq
      %v337 = vshrl.u32 %v336, 7
      %v338 = vsub.s32 2, %v337
      %v339 = vrot.slane %v303, %v338
      %v340 = vmul.f32 %v320, %v339
      %v341 = vmul.f32 %v321, %v339
      %v342 = vmul.f32 %v322, %v339
      %v343 = vmul.f32 %v323, %v339
      %v344 = vmul.f32 %v324, %v339
      %v345 = vmul.f32 %v325, %v339
      %v346 = vmul.f32 %v326, %v339
      %v347 = vmul.f32 %v327, %v339
      %v348 = vsel %vm328, %v320, %v340
      %v349 = vsel %vm329, %v321, %v341
      %v350 = vsel %vm330, %v322, %v342
      %v351 = vsel %vm331, %v323, %v343
      %v352 = vsel %vm332, %v324, %v344
      %v353 = vsel %vm333, %v325, %v345
      %v354 = vsel %vm334, %v326, %v346
      %v355 = vsel %vm335, %v327, %v347
      %v356 = vpack.c.bf16 %v349, %v348
      %v357 = vpack.c.bf16 %v351, %v350
      %v358 = vpack.c.bf16 %v353, %v352
      %v359 = vpack.c.bf16 %v355, %v354
      %v364 = vunpack.c.l.b16 %v356
      %v365 = vunpack.c.h.b16 %v356
      %v366 = vunpack.c.l.b16 %v357
      %v367 = vunpack.c.h.b16 %v357
      %v368 = vunpack.c.l.b16 %v358
      %v369 = vunpack.c.h.b16 %v358
      %v370 = vunpack.c.l.b16 %v359
      %v371 = vunpack.c.h.b16 %v359
      %v372 = vpack.c.b16 %v364, %v364
      %v373 = vpack.c.b16 %v365, %v365
      %v374 = vpack.c.b16 %v366, %v366
      %v375 = vpack.c.b16 %v367, %v367
      %v376 = vpack.c.b16 %v368, %v368
      %v377 = vpack.c.b16 %v369, %v369
      %v378 = vpack.c.b16 %v370, %v370
      %v379 = vpack.c.b16 %v371, %v371
      %vm388 = vcmask 125952
      %389 = vst.msk [vmem:[%s172] sm:$0xf] %vm388, %v372
      %390 = vst.msk [vmem:[%s172 + $0x4] sm:$0xf] %vm388, %v373
      %391 = vst.msk [vmem:[%s172 + $0x8] sm:$0xf] %vm388, %v374
      %392 = vst.msk [vmem:[%s172 + $0xc] sm:$0xf] %vm388, %v375
      %393 = vst.msk [vmem:[%s172 + $0x10] sm:$0xf] %vm388, %v376
      %394 = vst.msk [vmem:[%s172 + $0x14] sm:$0xf] %vm388, %v377
      %395 = vst.msk [vmem:[%s172 + $0x18] sm:$0xf] %vm388, %v378
      %396 = vst.msk [vmem:[%s172 + $0x1c] sm:$0xf] %vm388, %v379
      %s397 = smul.u32 8, %s14
      %p398 = scmp.lt.s32.totalorder %s397, 15
      %s399 = scalar_select %p398, %s397, 15
      %s400 = smul.addr %s399, 4
      %s401 = scalar_lea.vmem %s3, %s400
      // Predicated region
      $region33: #{head_block_forward.3} parent=31 // pred_check
        %p402 = pneg %p100
      $region34: #{head_block_forward.3} parent=31 // pred_check_branch
        %404 = sbr.rel (%p402) target = $region36
      $region35: #{head_block_forward.3} parent=31 // pred_region
        %s405 = smul.u32 8, %s14
      $region36: #{head_block_forward.3} parent=31 // pred_fallthru
        _
    $region32: #{head_block_forward.3} parent=5 // pred_fallthru
      _
    %p406 = scmp.le.s32.totalorder 2, %s9
    // Predicated region
    $region37: #{head_block_forward.3} parent=5 // pred_check
      %p407 = pneg %p406
    $region38: #{head_block_forward.3} parent=5 // pred_check_branch
      %409 = sbr.rel (%p407) target = $region40
    $region39: #{head_block_forward.3} parent=5 // pred_region
      %s410 = ssub.s32 %s9, 2
      // Predicated region
      $region41: #{head_block_forward.3} parent=39 // pred_check
        %p411 = pneg %p106
      $region42: #{head_block_forward.3} parent=39 // pred_check_branch
        %413 = sbr.rel (%p411) target = $region44
      $region43: #{head_block_forward.3} parent=39 // pred_region
        %s414 = smul.u32 8, %s15
        %p415 = scmp.lt.s32.totalorder %s414, 15
        %s416 = scalar_select %p415, %s414, 15
        %s417 = smul.addr %s416, 4
        %s418 = scalar_lea.vmem %s3, %s417
      $region44: #{head_block_forward.3} parent=39 // pred_fallthru
        _
    $region40: #{head_block_forward.3} parent=5 // pred_fallthru
      _
  $region6: #{head_block_forward.3} parent=0 // loop_footer
    %s13 = sadd.s32 1, %s9
  $region7: #{head_block_forward.3} parent=0 // loop_footer_branch
    %8 = sbr.rel target = $region3
  $region8: #{head_block_forward.3} parent=0 // loop_exit
    _

// kernel: head_block_forward.4
$region0: #{head_block_forward.4}
  #allocation0 [shape = 'u32[]', space=smem, size = 0x4, offset = 0x4, fixed_abs, tag = 'smem constant byte address 0x4 - core index']
  #allocation1 [shape = 'u32[144,128]{1,0:T(1,128)}', space=vmem, size = 0x12000, scoped, tag = 'internal scratch']
  %s0 = inlined_call_operand.vmem [shape: bf16[32,144], index: 0, kind: input, shape index: {}]
  %s1 = inlined_call_operand.vmem [shape: bf16[144,32], index: 1, kind: input, shape index: {}]
  %s2 = inlined_call_operand.vmem [shape: f32[3,32], index: 2, kind: input, shape index: {}]
  %s3 = inlined_call_operand.vmem [shape: bf16[32,32], index: 3, kind: input, shape index: {}]
  %s4 = inlined_call_operand.vmem [shape: f32[3,32], index: 4, kind: input, shape index: {}]
  %s5 = inlined_call_operand.vmem [shape: bf16[32,32], index: 5, kind: output, shape index: {}]
  %s6 = sld [smem:[#allocation0]]
  $region53: #{head_block_forward.4} parent=0
    _
  %s8 = ssub.s32 1, %s6
  %s9 = scalar_select 0, %s8, %s6
  loop: start=0, step=1, limit=4
  $region2: #{head_block_forward.4} parent=0 // loop_pre_header
    _
  $region3: #{head_block_forward.4} parent=0 // loop_header
    %s11 = sphi 0, %s15
    %p12 = scmp.ge.s32.totalorder %s11, 4
    %s21 = sphi 0, %s23
    %s24 = sphi 0, %s21
    %s25 = sphi 0, %s24
    %s41 = sphi 0, %s25
    %s45 = sphi 0, %s45
    %s47 = sphi 0, %s45
    %s48 = sphi 0, %s47
    %s62 = sphi 0, %s48
    %s66 = sphi 0, %s66
    %s68 = sphi 0, %s66
    %s69 = sphi 0, %s68
    %s83 = sphi 0, %s69
    %s87 = sphi 0, %s87
    %s89 = sphi 0, %s87
    %s90 = sphi 0, %s89
    %s104 = sphi 0, %s90
    %s108 = sphi 0, %s108
    %s110 = sphi 0, %s108
    %s111 = sphi 0, %s110
    %s125 = sphi 0, %s111
    %s131 = sphi 0, %s133
    %s134 = sphi 0, %s131
    %s135 = sphi 0, %s134
    %s151 = sphi 0, %s135
  $region4: #{head_block_forward.4} parent=0 // loop_header_branch
    %14 = sbr.rel (%p12) target = $region8
  $region5: #{head_block_forward.4} parent=0 // loop_body
    %s16 = ssub.s32 %s11, 1
    %s17 = ssub.s32 %s11, 2
    %s18 = sadd.s32 %s11, 1
    %s19 = ssub.s32 %s11, %s18
    %p20 = scmp.eq.s32.totalorder %s19, 0
    %s22 = sadd.s32 %s21, 1
    %s23 = scalar_select %p20, %s21, %s22
    %p26 = pneg %p20
    %p27 = scmp.eq.s32.totalorder %s11, 1
    %p28 = por %p26, %p27
    %p29 = scmp.ne.s32.totalorder %s21, %s24
    %p30 = scmp.eq.s32.totalorder %s11, 0
    %p31 = por %p29, %p30
    %p32 = scmp.ne.s32.totalorder %s21, %s24
    %p33 = scmp.eq.s32.totalorder %s16, 1
    %p34 = por %p32, %p33
    %p35 = scmp.ne.s32.totalorder %s24, %s25
    %p36 = scmp.eq.s32.totalorder %s16, 0
    %p37 = por %p35, %p36
    %p38 = scmp.ne.s32.totalorder %s24, %s25
    %p39 = scmp.eq.s32.totalorder %s17, 1
    %p40 = por %p38, %p39
    %p42 = scmp.ne.s32.totalorder %s25, %s41
    %p43 = scmp.eq.s32.totalorder %s17, 0
    %p44 = por %p42, %p43
    %s46 = sadd.s32 %s45, 1
    %p49 = scmp.eq.s32.totalorder %s11, 1
    %p50 = scmp.ne.s32.totalorder %s45, %s47
    %p51 = scmp.eq.s32.totalorder %s11, 0
    %p52 = por %p50, %p51
    %p53 = scmp.ne.s32.totalorder %s45, %s47
    %p54 = scmp.eq.s32.totalorder %s16, 1
    %p55 = por %p53, %p54
    %p56 = scmp.ne.s32.totalorder %s47, %s48
    %p57 = scmp.eq.s32.totalorder %s16, 0
    %p58 = por %p56, %p57
    %p59 = scmp.ne.s32.totalorder %s47, %s48
    %p60 = scmp.eq.s32.totalorder %s17, 1
    %p61 = por %p59, %p60
    %p63 = scmp.ne.s32.totalorder %s48, %s62
    %p64 = scmp.eq.s32.totalorder %s17, 0
    %p65 = por %p63, %p64
    %s67 = sadd.s32 %s66, 1
    %p70 = scmp.eq.s32.totalorder %s11, 1
    %p71 = scmp.ne.s32.totalorder %s66, %s68
    %p72 = scmp.eq.s32.totalorder %s11, 0
    %p73 = por %p71, %p72
    %p74 = scmp.ne.s32.totalorder %s66, %s68
    %p75 = scmp.eq.s32.totalorder %s16, 1
    %p76 = por %p74, %p75
    %p77 = scmp.ne.s32.totalorder %s68, %s69
    %p78 = scmp.eq.s32.totalorder %s16, 0
    %p79 = por %p77, %p78
    %p80 = scmp.ne.s32.totalorder %s68, %s69
    %p81 = scmp.eq.s32.totalorder %s17, 1
    %p82 = por %p80, %p81
    %p84 = scmp.ne.s32.totalorder %s69, %s83
    %p85 = scmp.eq.s32.totalorder %s17, 0
    %p86 = por %p84, %p85
    %s88 = sadd.s32 %s87, 1
    %p91 = scmp.eq.s32.totalorder %s11, 1
    %p92 = scmp.ne.s32.totalorder %s87, %s89
    %p93 = scmp.eq.s32.totalorder %s11, 0
    %p94 = por %p92, %p93
    %p95 = scmp.ne.s32.totalorder %s87, %s89
    %p96 = scmp.eq.s32.totalorder %s16, 1
    %p97 = por %p95, %p96
    %p98 = scmp.ne.s32.totalorder %s89, %s90
    %p99 = scmp.eq.s32.totalorder %s16, 0
    %p100 = por %p98, %p99
    %p101 = scmp.ne.s32.totalorder %s89, %s90
    %p102 = scmp.eq.s32.totalorder %s17, 1
    %p103 = por %p101, %p102
    %p105 = scmp.ne.s32.totalorder %s90, %s104
    %p106 = scmp.eq.s32.totalorder %s17, 0
    %p107 = por %p105, %p106
    %s109 = sadd.s32 %s108, 1
    %p112 = scmp.eq.s32.totalorder %s11, 1
    %p113 = scmp.ne.s32.totalorder %s108, %s110
    %p114 = scmp.eq.s32.totalorder %s11, 0
    %p115 = por %p113, %p114
    %p116 = scmp.ne.s32.totalorder %s108, %s110
    %p117 = scmp.eq.s32.totalorder %s16, 1
    %p118 = por %p116, %p117
    %p119 = scmp.ne.s32.totalorder %s110, %s111
    %p120 = scmp.eq.s32.totalorder %s16, 0
    %p121 = por %p119, %p120
    %p122 = scmp.ne.s32.totalorder %s110, %s111
    %p123 = scmp.eq.s32.totalorder %s17, 1
    %p124 = por %p122, %p123
    %p126 = scmp.ne.s32.totalorder %s111, %s125
    %p127 = scmp.eq.s32.totalorder %s17, 0
    %p128 = por %p126, %p127
    %s129 = ssub.s32 %s11, %s18
    %p130 = scmp.eq.s32.totalorder %s129, 0
    %s132 = sadd.s32 %s131, 1
    %s133 = scalar_select %p130, %s131, %s132
    %p136 = pneg %p130
    %p137 = scmp.eq.s32.totalorder %s11, 1
    %p138 = por %p136, %p137
    %p139 = scmp.ne.s32.totalorder %s131, %s134
    %p140 = scmp.eq.s32.totalorder %s11, 0
    %p141 = por %p139, %p140
    %p142 = scmp.ne.s32.totalorder %s131, %s134
    %p143 = scmp.eq.s32.totalorder %s16, 1
    %p144 = por %p142, %p143
    %p145 = scmp.ne.s32.totalorder %s134, %s135
    %p146 = scmp.eq.s32.totalorder %s16, 0
    %p147 = por %p145, %p146
    %p148 = scmp.ne.s32.totalorder %s134, %s135
    %p149 = scmp.eq.s32.totalorder %s17, 1
    %p150 = por %p148, %p149
    %p152 = scmp.ne.s32.totalorder %s135, %s151
    %p153 = scmp.eq.s32.totalorder %s17, 0
    %p154 = por %p152, %p153
    %p155 = scmp.le.s32.totalorder 1, %s11
    %p156 = scmp.lt.s32.totalorder %s11, 3
    %p157 = pnand %p155, %p156
    %p158 = pneg %p157
    // Predicated region
    $region9: #{head_block_forward.4} parent=5 // pred_check
      _
    $region10: #{head_block_forward.4} parent=5 // pred_check_branch
      %160 = sbr.rel (%p157) target = $region12
    $region11: #{head_block_forward.4} parent=5 // pred_region
      %s161 = ssub.s32 %s11, 1
      // Predicated region
      $region13: #{head_block_forward.4} parent=11 // pred_check
        %p162 = pneg %p58
      $region14: #{head_block_forward.4} parent=11 // pred_check_branch
        %164 = sbr.rel (%p162) target = $region16
      $region15: #{head_block_forward.4} parent=11 // pred_region
        _
      $region16: #{head_block_forward.4} parent=11 // pred_fallthru
        _
      // Predicated region
      $region17: #{head_block_forward.4} parent=11 // pred_check
        %p165 = pneg %p79
      $region18: #{head_block_forward.4} parent=11 // pred_check_branch
        %167 = sbr.rel (%p165) target = $region20
      $region19: #{head_block_forward.4} parent=11 // pred_region
        _
      $region20: #{head_block_forward.4} parent=11 // pred_fallthru
        _
      // Predicated region
      $region21: #{head_block_forward.4} parent=11 // pred_check
        %p168 = pneg %p100
      $region22: #{head_block_forward.4} parent=11 // pred_check_branch
        %170 = sbr.rel (%p168) target = $region24
      $region23: #{head_block_forward.4} parent=11 // pred_region
        _
      $region24: #{head_block_forward.4} parent=11 // pred_fallthru
        _
      // Predicated region
      $region25: #{head_block_forward.4} parent=11 // pred_check
        %p171 = pneg %p121
      $region26: #{head_block_forward.4} parent=11 // pred_check_branch
        %173 = sbr.rel (%p171) target = $region28
      $region27: #{head_block_forward.4} parent=11 // pred_region
        _
      $region28: #{head_block_forward.4} parent=11 // pred_fallthru
        _
    $region12: #{head_block_forward.4} parent=5 // pred_fallthru
      _
    %p174 = scmp.lt.s32.totalorder %s11, 2
    // Predicated region
    $region29: #{head_block_forward.4} parent=5 // pred_check
      %p175 = pneg %p174
    $region30: #{head_block_forward.4} parent=5 // pred_check_branch
      %177 = sbr.rel (%p175) target = $region32
    $region31: #{head_block_forward.4} parent=5 // pred_region
      // Predicated region
      $region33: #{head_block_forward.4} parent=31 // pred_check
        %p178 = pneg %p31
      $region34: #{head_block_forward.4} parent=31 // pred_check_branch
        %180 = sbr.rel (%p178) target = $region36
      $region35: #{head_block_forward.4} parent=31 // pred_region
        %s181 = smul.u32 2, %s11
        %p182 = scmp.lt.s32.totalorder %s181, 3
        %s183 = scalar_select %p182, %s181, 3
        %s184 = smul.addr %s183, 2
        %s185 = smul.addr %s184, 4
        %s186 = scalar_lea.vmem %s0, %s185
        %s187 = smul.u32 2, %s11
      $region36: #{head_block_forward.4} parent=31 // pred_fallthru
        _
    $region32: #{head_block_forward.4} parent=5 // pred_fallthru
      _
    %p188 = scmp.le.s32.totalorder 1, %s11
    %p189 = scmp.lt.s32.totalorder %s11, 3
    %p190 = pnand %p188, %p189
    %p191 = pneg %p190
    // Predicated region
    $region37: #{head_block_forward.4} parent=5 // pred_check
      _
    $region38: #{head_block_forward.4} parent=5 // pred_check_branch
      %193 = sbr.rel (%p190) target = $region40
    $region39: #{head_block_forward.4} parent=5 // pred_region
      %s194 = ssub.s32 %s11, 1
      %s195 = smul.u32 2, %s16
      %p196 = scmp.lt.s32.totalorder %s195, 3
      %s197 = scalar_select %p196, %s195, 3
      %s198 = smul.addr %s197, 2
      %s199 = smul.addr %s198, 4
      %s200 = scalar_lea.vmem %s0, %s199
      %p201 = pneg %p37
      %p202 = pneg %p34
      %p203 = pneg %p58
      %p204 = pneg %p55
      %p205 = pneg %p79
      %p206 = pneg %p76
      %p207 = pneg %p100
      %p208 = pneg %p97
      %p209 = pneg %p121
      %p210 = pneg %p118
      %p211 = pneg %p147
      %p212 = pneg %p144
      %s213 = smul.u32 2, %s16
      %p214 = scmp.lt.s32.totalorder %s213, 3
      %s215 = scalar_select %p214, %s213, 3
      %s216 = smul.addr %s215, 4
      %s217 = scalar_lea.vmem %s5, %s216
      %s218 = smul.u32 2, %s16
      %p219 = scmp.lt.s32.totalorder %s218, 3
      %s220 = scalar_select %p219, %s218, 3
      %s221 = smul.addr %s220, 2
      %s222 = smul.addr %s221, 4
      %s223 = scalar_lea.vmem %s0, %s222
      %s224 = smul.u32 2, %s16
      %s225 = smul.u32 2, %s16
      %p226 = scmp.lt.s32.totalorder %s225, 3
      %s227 = scalar_select %p226, %s225, 3
      %s228 = smul.addr %s227, 4
      %s229 = scalar_lea.vmem %s5, %s228
      %s230 = smul.u32 2, %s16
      %v232 = vld [vmem:[%s223] sm:$0xff]
      %v233 = vld [vmem:[%s223 + $0x8] sm:$0xff]
      %v234 = vld [vmem:[%s1] sm:$0xf]
      %v235 = vld [vmem:[%s1 + $0x4] sm:$0xf]
      %v236 = vld [vmem:[%s1 + $0x8] sm:$0xf]
      %v237 = vld [vmem:[%s1 + $0xc] sm:$0xf]
      %v238 = vld [vmem:[%s1 + $0x10] sm:$0xf]
      %v239 = vld [vmem:[%s1 + $0x14] sm:$0xf]
      %v240 = vld [vmem:[%s1 + $0x18] sm:$0xf]
      %v241 = vld [vmem:[%s1 + $0x1c] sm:$0xf]
      %v242 = vld [vmem:[%s1 + $0x20] sm:$0xf]
      %v243 = vld [vmem:[%s1 + $0x24] sm:$0xf]
      %v244 = vld [vmem:[%s1 + $0x28] sm:$0xf]
      %v245 = vld [vmem:[%s1 + $0x2c] sm:$0xf]
      %v246 = vld [vmem:[%s1 + $0x30] sm:$0xf]
      %v247 = vld [vmem:[%s1 + $0x34] sm:$0xf]
      %v248 = vld [vmem:[%s1 + $0x38] sm:$0xf]
      %v249 = vld [vmem:[%s1 + $0x3c] sm:$0xf]
      %v250 = vld [vmem:[%s1 + $0x40] sm:$0xf]
      %v251 = vld [vmem:[%s1 + $0x44] sm:$0xf]
      %v252 = vld [vmem:[%s2] sm:$0x7]
      %v253 = vld [vmem:[%s3] sm:$0xf]
      %v254 = vld [vmem:[%s3 + $0x4] sm:$0xf]
      %v255 = vld [vmem:[%s3 + $0x8] sm:$0xf]
      %v256 = vld [vmem:[%s3 + $0xc] sm:$0xf]
      %v257 = vld [vmem:[%s4] sm:$0x7]
      %v260 = vunpack.c.l.b16 %v232
      %v261 = vunpack.c.h.b16 %v232
      %v262 = vunpack.c.l.b16 %v233
      %v263 = vunpack.c.h.b16 %v233
      %v264 = vpack.c.b16 %v262, %v260
      %v265 = vpack.c.b16 %v263, %v261
      %v285 = vunpack.c.l.b16 %v234
      %v286 = vunpack.c.l.b16 %v235
      %v287 = vunpack.c.l.b16 %v236
      %v288 = vunpack.c.l.b16 %v237
      %v289 = vunpack.c.l.b16 %v238
      %v290 = vunpack.c.l.b16 %v239
      %v291 = vunpack.c.l.b16 %v240
      %v292 = vunpack.c.l.b16 %v241
      %v293 = vunpack.c.l.b16 %v242
      %v294 = vunpack.c.l.b16 %v243
      %v295 = vunpack.c.l.b16 %v244
      %v296 = vunpack.c.l.b16 %v245
      %v297 = vunpack.c.l.b16 %v246
      %v298 = vunpack.c.l.b16 %v247
      %v299 = vunpack.c.l.b16 %v248
      %v300 = vunpack.c.l.b16 %v249
      %v301 = vunpack.c.l.b16 %v250
      %v302 = vunpack.c.l.b16 %v251
      %v303 = vpack.c.b16 %v286, %v285
      %v304 = vpack.c.b16 %v288, %v287
      %v305 = vpack.c.b16 %v290, %v289
      %v306 = vpack.c.b16 %v292, %v291
      %v307 = vpack.c.b16 %v294, %v293
      %v308 = vpack.c.b16 %v296, %v295
      %v309 = vpack.c.b16 %v298, %v297
      %v310 = vpack.c.b16 %v300, %v299
      %v311 = vpack.c.b16 %v302, %v301
      %vm321 = vcmask 130048
      %v323 = vsel %vm321, %v265, 0
      %325 = vmatprep.subr.bf16.mxu0 0
      %326 = vmatpush1.bf16.msra.mxu0 %v310
      %327 = vmatprep.subr.bf16.mxu0 0
      %328 = vmatpush1.bf16.msra.mxu0 %v309
      %329 = vmatprep.subr.bf16.mxu0 0
      %330 = vmatpush1.bf16.msra.mxu0 %v308
      %331 = vmatprep.subr.bf16.mxu0 0
      %332 = vmatpush1.bf16.msra.mxu0 %v307
      %333 = vmatprep.subr.bf16.mxu0 0
      %334 = vmatpush1.bf16.msra.mxu0 %v306
      %335 = vmatprep.subr.bf16.mxu0 0
      %336 = vmatpush1.bf16.msra.mxu0 %v305
      %337 = vmatprep.subr.bf16.mxu0 0
      %338 = vmatpush1.bf16.msra.mxu0 %v304
      %339 = vmatprep.subr.bf16.mxu0 0
      %340 = vmatpush1.bf16.msra.mxu0 %v303
      %341 = vmatprep.subr.bf16.mxu0 0
      %342 = vmatpush2.bf16.msra.mxu0 0
      %343 = vmatprep.subr.bf16.mxu0 0
      %344 = vmatpush2.bf16.msra.mxu0 0
      %345 = vmatprep.subr.bf16.mxu0 0
      %346 = vmatpush2.bf16.msra.mxu0 0
      %347 = vmatprep.subr.bf16.mxu0 0
      %348 = vmatpush2.bf16.msra.mxu0 0
      %349 = vmatprep.subr.bf16.mxu0 0
      %350 = vmatpush2.bf16.msra.mxu0 0
      %351 = vmatprep.subr.bf16.mxu0 0
      %352 = vmatpush2.bf16.msra.mxu0 0
      %353 = vmatprep.subr.bf16.mxu0 0
      %354 = vmatpush2.bf16.msra.mxu0 0
      %355 = vmatprep.subr.bf16.mxu0 0
      %356 = vmatpush2.bf16.msra.mxu0 %v311
      %357 = vmatprep.mubr.bf16.mxu0 %v323
      %358 = vmatmul.mubr.bf16.gmra.mxu0 %v264
      %v359 = vpop.f32.mrf.mxu0
      %v360 = vadd.f32 0.0, %v359
      %v361 = vpop.f32.mrf.mxu0
      %v362 = vpop.f32.mrf.mxu0
      %v363 = vadd.f32 0.0, %v362
      %v364 = vpop.f32.mrf.mxu0
      %365 = vdwg.mxu0
      %v366 = vlaneseq
      %v367 = vshrl.u32 %v366, 7
      %v368 = vsub.s32 0, %v367
      %v369 = vrot.slane %v252, %v368
      %v370 = vmul.f32 %v360, %v369
      %v371 = vmul.f32 %v363, %v369
      %v372 = vlaneseq
      %v373 = vshrl.u32 %v372, 7
      %v374 = vsub.s32 1, %v373
      %v375 = vrot.slane %v252, %v374
      %v376 = vadd.f32 %v370, %v375
      %v377 = vadd.f32 %v371, %v375
      %vm378 = vcmp.gt.f32.partialorder %v376, 0.0
      %vm379 = vcmp.gt.f32.partialorder %v377, 0.0
      %v380 = vlaneseq
      %v381 = vshrl.u32 %v380, 7
      %v382 = vsub.s32 2, %v381
      %v383 = vrot.slane %v252, %v382
      %v384 = vmul.f32 %v376, %v383
      %v385 = vmul.f32 %v377, %v383
      %v386 = vsel %vm378, %v376, %v384
      %v387 = vsel %vm379, %v377, %v385
      %v388 = vpack.c.bf16 %v387, %v386
      %v393 = vunpack.c.l.b16 %v253
      %v394 = vunpack.c.l.b16 %v254
      %v395 = vunpack.c.l.b16 %v255
      %v396 = vunpack.c.l.b16 %v256
      %v397 = vpack.c.b16 %v394, %v393
      %v398 = vpack.c.b16 %v396, %v395
      %vm401 = vcmask 261120
      %v403 = vsel %vm401, %v388, 0
      %405 = vmatprep.subr.bf16.mxu0 0
      %406 = vmatpush1.bf16.msra.mxu0 0
      %407 = vmatprep.subr.bf16.mxu0 0
      %408 = vmatpush1.bf16.msra.mxu0 0
      %409 = vmatprep.subr.bf16.mxu0 0
      %410 = vmatpush1.bf16.msra.mxu0 0
      %411 = vmatprep.subr.bf16.mxu0 0
      %412 = vmatpush1.bf16.msra.mxu0 0
      %413 = vmatprep.subr.bf16.mxu0 0
      %414 = vmatpush1.bf16.msra.mxu0 0
      %415 = vmatprep.subr.bf16.mxu0 0
      %416 = vmatpush1.bf16.msra.mxu0 0
      %417 = vmatprep.subr.bf16.mxu0 0
      %418 = vmatpush1.bf16.msra.mxu0 %v398
      %419 = vmatprep.subr.bf16.mxu0 0
      %420 = vmatpush1.bf16.msra.mxu0 %v397
      %421 = vmatprep.subr.bf16.mxu0 0
      %422 = vmatpush2.bf16.msra.mxu0 0
      %423 = vmatprep.subr.bf16.mxu0 0
      %424 = vmatpush2.bf16.msra.mxu0 0
      %425 = vmatprep.subr.bf16.mxu0 0
      %426 = vmatpush2.bf16.msra.mxu0 0
      %427 = vmatprep.subr.bf16.mxu0 0
      %428 = vmatpush2.bf16.msra.mxu0 0
      %429 = vmatprep.subr.bf16.mxu0 0
      %430 = vmatpush2.bf16.msra.mxu0 0
      %431 = vmatprep.subr.bf16.mxu0 0
      %432 = vmatpush2.bf16.msra.mxu0 0
      %433 = vmatprep.subr.bf16.mxu0 0
      %434 = vmatpush2.bf16.msra.mxu0 0
      %435 = vmatprep.subr.bf16.mxu0 0
      %436 = vmatpush2.bf16.msra.mxu0 0
      %437 = vmatprep.mubr.bf16.mxu0 0
      %438 = vmatmul.mubr.bf16.gmra.mxu0 %v403
      %v439 = vpop.f32.mrf.mxu0
      %v440 = vadd.f32 0.0, %v439
      %v441 = vpop.f32.mrf.mxu0
      %v442 = vpop.f32.mrf.mxu0
      %v443 = vadd.f32 0.0, %v442
      %v444 = vpop.f32.mrf.mxu0
      %445 = vdwg.mxu0
      %v446 = vlaneseq
      %v447 = vshrl.u32 %v446, 7
      %v448 = vsub.s32 0, %v447
      %v449 = vrot.slane %v257, %v448
      %v450 = vmul.f32 %v440, %v449
      %v451 = vmul.f32 %v443, %v449
      %v452 = vlaneseq
      %v453 = vshrl.u32 %v452, 7
      %v454 = vsub.s32 1, %v453
      %v455 = vrot.slane %v257, %v454
      %v456 = vadd.f32 %v450, %v455
      %v457 = vadd.f32 %v451, %v455
      %vm458 = vcmp.gt.f32.partialorder %v456, 0.0
      %vm459 = vcmp.gt.f32.partialorder %v457, 0.0
      %v460 = vlaneseq
      %v461 = vshrl.u32 %v460, 7
      %v462 = vsub.s32 2, %v461
      %v463 = vrot.slane %v257, %v462
      %v464 = vmul.f32 %v456, %v463
      %v465 = vmul.f32 %v457, %v463
      %v466 = vsel %vm458, %v456, %v464
      %v467 = vsel %vm459, %v457, %v465
      %v468 = vpack.c.bf16 %v467, %v466
      %v470 = vunpack.c.l.b16 %v468
      %v471 = vunpack.c.h.b16 %v468
      %v472 = vpack.c.b16 %v470, %v470
      %v473 = vpack.c.b16 %v471, %v471
      %vm476 = vcmask 257024
      %477 = vst.msk [vmem:[%s229] sm:$0xf] %vm476, %v472
      %478 = vst.msk [vmem:[%s229 + $0x4] sm:$0xf] %vm476, %v473
      %s479 = smul.u32 2, %s16
      %p480 = scmp.lt.s32.totalorder %s479, 3
      %s481 = scalar_select %p480, %s479, 3
      %s482 = smul.addr %s481, 4
      %s483 = scalar_lea.vmem %s5, %s482
      // Predicated region
      $region41: #{head_block_forward.4} parent=39 // pred_check
        %p484 = pneg %p144
      $region42: #{head_block_forward.4} parent=39 // pred_check_branch
        %486 = sbr.rel (%p484) target = $region44
      $region43: #{head_block_forward.4} parent=39 // pred_region
        %s487 = smul.u32 2, %s16
      $region44: #{head_block_forward.4} parent=39 // pred_fallthru
        _
    $region40: #{head_block_forward.4} parent=5 // pred_fallthru
      _
    %p488 = scmp.le.s32.totalorder 2, %s11
    // Predicated region
    $region45: #{head_block_forward.4} parent=5 // pred_check
      %p489 = pneg %p488
    $region46: #{head_block_forward.4} parent=5 // pred_check_branch
      %491 = sbr.rel (%p489) target = $region48
    $region47: #{head_block_forward.4} parent=5 // pred_region
      %s492 = ssub.s32 %s11, 2
      // Predicated region
      $region49: #{head_block_forward.4} parent=47 // pred_check
        %p493 = pneg %p150
      $region50: #{head_block_forward.4} parent=47 // pred_check_branch
        %495 = sbr.rel (%p493) target = $region52
      $region51: #{head_block_forward.4} parent=47 // pred_region
        %s496 = smul.u32 2, %s17
        %p497 = scmp.lt.s32.totalorder %s496, 3
        %s498 = scalar_select %p497, %s496, 3
        %s499 = smul.addr %s498, 4
        %s500 = scalar_lea.vmem %s5, %s499
      $region52: #{head_block_forward.4} parent=47 // pred_fallthru
        _
    $region48: #{head_block_forward.4} parent=5 // pred_fallthru
      _
  $region6: #{head_block_forward.4} parent=0 // loop_footer
    %s15 = sadd.s32 1, %s11
  $region7: #{head_block_forward.4} parent=0 // loop_footer_branch
    %10 = sbr.rel target = $region3
  $region8: #{head_block_forward.4} parent=0 // loop_exit
    _

// kernel: head_block_forward.5
$region0: #{head_block_forward.5}
  #allocation0 [shape = 'u32[]', space=smem, size = 0x4, offset = 0x4, fixed_abs, tag = 'smem constant byte address 0x4 - core index']
  #allocation1 [shape = 'u32[144,128]{1,0:T(1,128)}', space=vmem, size = 0x12000, scoped, tag = 'internal scratch']
  %s0 = inlined_call_operand.vmem [shape: bf16[2,16,144], index: 0, kind: input, shape index: {}]
  %s1 = inlined_call_operand.vmem [shape: bf16[2,16,16], index: 1, kind: input, shape index: {}]
  %s2 = inlined_call_operand.vmem [shape: bf16[144,16], index: 2, kind: input, shape index: {}]
  %s3 = inlined_call_operand.vmem [shape: f32[3,16], index: 3, kind: input, shape index: {}]
  %s4 = inlined_call_operand.vmem [shape: bf16[16,16], index: 4, kind: input, shape index: {}]
  %s5 = inlined_call_operand.vmem [shape: f32[3,16], index: 5, kind: input, shape index: {}]
  %s6 = inlined_call_operand.vmem [shape: f32[16,4], index: 6, kind: input, shape index: {}]
  %s7 = inlined_call_operand.vmem [shape: f32[2,4], index: 7, kind: input, shape index: {}]
  %s8 = inlined_call_operand.vmem [shape: f32[4,16], index: 8, kind: input, shape index: {}]
  %s9 = inlined_call_operand.vmem [shape: f32[1,16], index: 9, kind: input, shape index: {}]
  %s10 = inlined_call_operand.vmem [shape: f32[1,16], index: 10, kind: input, shape index: {}]
  %s11 = inlined_call_operand.hbm [shape: f32[2,16,16], index: 11, kind: output, shape index: {}]
  %s12 = sld [smem:[#allocation0]]
  $region77: #{head_block_forward.5} parent=0
    _
  %s14 = ssub.s32 1, %s12
  %s15 = scalar_select 0, %s14, %s12
  $region1: #{head_block_forward.5} parent=0
    #allocation2 [shape = 'u8[16384]{0}', space=vmem, size = 0x4000, scoped, tag = 'output window, operand 0']
    #allocation3 [shape = 's32[2]{0}', space=sflag, size = 0x8, scoped, tag = 'scoped memory for head_block_forward.5']
    %16 = vsyncpa [#allocation3], 0
    %s17 = scalar_lea.sflag [#allocation3], 1
    %18 = vsyncpa %s17, 0
    loop: start=0, step=1, limit=4
    $region2: #{head_block_forward.5} parent=1 // loop_pre_header
      _
    $region3: #{head_block_forward.5} parent=1 // loop_header
      %s20 = sphi 0, %s24
      %p21 = scmp.ge.s32.totalorder %s20, 4
      %s30 = sphi 0, %s32
      %s33 = sphi 0, %s30
      %s34 = sphi 0, %s33
      %s50 = sphi 0, %s34
      %s56 = sphi 0, %s58
      %s59 = sphi 0, %s56
      %s60 = sphi 0, %s59
      %s76 = sphi 0, %s60
      %s80 = sphi 0, %s80
      %s82 = sphi 0, %s80
      %s83 = sphi 0, %s82
      %s97 = sphi 0, %s83
      %s101 = sphi 0, %s101
      %s103 = sphi 0, %s101
      %s104 = sphi 0, %s103
      %s118 = sphi 0, %s104
      %s122 = sphi 0, %s122
      %s124 = sphi 0, %s122
      %s125 = sphi 0, %s124
      %s139 = sphi 0, %s125
      %s143 = sphi 0, %s143
      %s145 = sphi 0, %s143
      %s146 = sphi 0, %s145
      %s160 = sphi 0, %s146
      %s164 = sphi 0, %s164
      %s166 = sphi 0, %s164
      %s167 = sphi 0, %s166
      %s181 = sphi 0, %s167
      %s185 = sphi 0, %s185
      %s187 = sphi 0, %s185
      %s188 = sphi 0, %s187
      %s202 = sphi 0, %s188
      %s206 = sphi 0, %s206
      %s208 = sphi 0, %s206
      %s209 = sphi 0, %s208
      %s223 = sphi 0, %s209
      %s227 = sphi 0, %s227
      %s229 = sphi 0, %s227
      %s230 = sphi 0, %s229
      %s244 = sphi 0, %s230
      %s248 = sphi 0, %s248
      %s250 = sphi 0, %s248
      %s251 = sphi 0, %s250
      %s265 = sphi 0, %s251
      %s271 = sphi 0, %s273
      %s274 = sphi 0, %s271
      %s275 = sphi 0, %s274
      %s291 = sphi 0, %s275
    $region4: #{head_block_forward.5} parent=1 // loop_header_branch
      %23 = sbr.rel (%p21) target = $region8
    $region5: #{head_block_forward.5} parent=1 // loop_body
      %s25 = ssub.s32 %s20, 1
      %s26 = ssub.s32 %s20, 2
      %s27 = sadd.s32 %s20, 1
      %s28 = ssub.s32 %s20, %s27
      %p29 = scmp.eq.s32.totalorder %s28, 0
      %s31 = sadd.s32 %s30, 1
      %s32 = scalar_select %p29, %s30, %s31
      %p35 = pneg %p29
      %p36 = scmp.eq.s32.totalorder %s20, 1
      %p37 = por %p35, %p36
      %p38 = scmp.ne.s32.totalorder %s30, %s33
      %p39 = scmp.eq.s32.totalorder %s20, 0
      %p40 = por %p38, %p39
      %p41 = scmp.ne.s32.totalorder %s30, %s33
      %p42 = scmp.eq.s32.totalorder %s25, 1
      %p43 = por %p41, %p42
      %p44 = scmp.ne.s32.totalorder %s33, %s34
      %p45 = scmp.eq.s32.totalorder %s25, 0
      %p46 = por %p44, %p45
      %p47 = scmp.ne.s32.totalorder %s33, %s34
      %p48 = scmp.eq.s32.totalorder %s26, 1
      %p49 = por %p47, %p48
      %p51 = scmp.ne.s32.totalorder %s34, %s50
      %p52 = scmp.eq.s32.totalorder %s26, 0
      %p53 = por %p51, %p52
      %s54 = ssub.s32 %s20, %s27
      %p55 = scmp.eq.s32.totalorder %s54, 0
      %s57 = sadd.s32 %s56, 1
      %s58 = scalar_select %p55, %s56, %s57
      %p61 = pneg %p55
      %p62 = scmp.eq.s32.totalorder %s20, 1
      %p63 = por %p61, %p62
      %p64 = scmp.ne.s32.totalorder %s56, %s59
      %p65 = scmp.eq.s32.totalorder %s20, 0
      %p66 = por %p64, %p65
      %p67 = scmp.ne.s32.totalorder %s56, %s59
      %p68 = scmp.eq.s32.totalorder %s25, 1
      %p69 = por %p67, %p68
      %p70 = scmp.ne.s32.totalorder %s59, %s60
      %p71 = scmp.eq.s32.totalorder %s25, 0
      %p72 = por %p70, %p71
      %p73 = scmp.ne.s32.totalorder %s59, %s60
      %p74 = scmp.eq.s32.totalorder %s26, 1
      %p75 = por %p73, %p74
      %p77 = scmp.ne.s32.totalorder %s60, %s76
      %p78 = scmp.eq.s32.totalorder %s26, 0
      %p79 = por %p77, %p78
      %s81 = sadd.s32 %s80, 1
      %p84 = scmp.eq.s32.totalorder %s20, 1
      %p85 = scmp.ne.s32.totalorder %s80, %s82
      %p86 = scmp.eq.s32.totalorder %s20, 0
      %p87 = por %p85, %p86
      %p88 = scmp.ne.s32.totalorder %s80, %s82
      %p89 = scmp.eq.s32.totalorder %s25, 1
      %p90 = por %p88, %p89
      %p91 = scmp.ne.s32.totalorder %s82, %s83
      %p92 = scmp.eq.s32.totalorder %s25, 0
      %p93 = por %p91, %p92
      %p94 = scmp.ne.s32.totalorder %s82, %s83
      %p95 = scmp.eq.s32.totalorder %s26, 1
      %p96 = por %p94, %p95
      %p98 = scmp.ne.s32.totalorder %s83, %s97
      %p99 = scmp.eq.s32.totalorder %s26, 0
      %p100 = por %p98, %p99
      %s102 = sadd.s32 %s101, 1
      %p105 = scmp.eq.s32.totalorder %s20, 1
      %p106 = scmp.ne.s32.totalorder %s101, %s103
      %p107 = scmp.eq.s32.totalorder %s20, 0
      %p108 = por %p106, %p107
      %p109 = scmp.ne.s32.totalorder %s101, %s103
      %p110 = scmp.eq.s32.totalorder %s25, 1
      %p111 = por %p109, %p110
      %p112 = scmp.ne.s32.totalorder %s103, %s104
      %p113 = scmp.eq.s32.totalorder %s25, 0
      %p114 = por %p112, %p113
      %p115 = scmp.ne.s32.totalorder %s103, %s104
      %p116 = scmp.eq.s32.totalorder %s26, 1
      %p117 = por %p115, %p116
      %p119 = scmp.ne.s32.totalorder %s104, %s118
      %p120 = scmp.eq.s32.totalorder %s26, 0
      %p121 = por %p119, %p120
      %s123 = sadd.s32 %s122, 1
      %p126 = scmp.eq.s32.totalorder %s20, 1
      %p127 = scmp.ne.s32.totalorder %s122, %s124
      %p128 = scmp.eq.s32.totalorder %s20, 0
      %p129 = por %p127, %p128
      %p130 = scmp.ne.s32.totalorder %s122, %s124
      %p131 = scmp.eq.s32.totalorder %s25, 1
      %p132 = por %p130, %p131
      %p133 = scmp.ne.s32.totalorder %s124, %s125
      %p134 = scmp.eq.s32.totalorder %s25, 0
      %p135 = por %p133, %p134
      %p136 = scmp.ne.s32.totalorder %s124, %s125
      %p137 = scmp.eq.s32.totalorder %s26, 1
      %p138 = por %p136, %p137
      %p140 = scmp.ne.s32.totalorder %s125, %s139
      %p141 = scmp.eq.s32.totalorder %s26, 0
      %p142 = por %p140, %p141
      %s144 = sadd.s32 %s143, 1
      %p147 = scmp.eq.s32.totalorder %s20, 1
      %p148 = scmp.ne.s32.totalorder %s143, %s145
      %p149 = scmp.eq.s32.totalorder %s20, 0
      %p150 = por %p148, %p149
      %p151 = scmp.ne.s32.totalorder %s143, %s145
      %p152 = scmp.eq.s32.totalorder %s25, 1
      %p153 = por %p151, %p152
      %p154 = scmp.ne.s32.totalorder %s145, %s146
      %p155 = scmp.eq.s32.totalorder %s25, 0
      %p156 = por %p154, %p155
      %p157 = scmp.ne.s32.totalorder %s145, %s146
      %p158 = scmp.eq.s32.totalorder %s26, 1
      %p159 = por %p157, %p158
      %p161 = scmp.ne.s32.totalorder %s146, %s160
      %p162 = scmp.eq.s32.totalorder %s26, 0
      %p163 = por %p161, %p162
      %s165 = sadd.s32 %s164, 1
      %p168 = scmp.eq.s32.totalorder %s20, 1
      %p169 = scmp.ne.s32.totalorder %s164, %s166
      %p170 = scmp.eq.s32.totalorder %s20, 0
      %p171 = por %p169, %p170
      %p172 = scmp.ne.s32.totalorder %s164, %s166
      %p173 = scmp.eq.s32.totalorder %s25, 1
      %p174 = por %p172, %p173
      %p175 = scmp.ne.s32.totalorder %s166, %s167
      %p176 = scmp.eq.s32.totalorder %s25, 0
      %p177 = por %p175, %p176
      %p178 = scmp.ne.s32.totalorder %s166, %s167
      %p179 = scmp.eq.s32.totalorder %s26, 1
      %p180 = por %p178, %p179
      %p182 = scmp.ne.s32.totalorder %s167, %s181
      %p183 = scmp.eq.s32.totalorder %s26, 0
      %p184 = por %p182, %p183
      %s186 = sadd.s32 %s185, 1
      %p189 = scmp.eq.s32.totalorder %s20, 1
      %p190 = scmp.ne.s32.totalorder %s185, %s187
      %p191 = scmp.eq.s32.totalorder %s20, 0
      %p192 = por %p190, %p191
      %p193 = scmp.ne.s32.totalorder %s185, %s187
      %p194 = scmp.eq.s32.totalorder %s25, 1
      %p195 = por %p193, %p194
      %p196 = scmp.ne.s32.totalorder %s187, %s188
      %p197 = scmp.eq.s32.totalorder %s25, 0
      %p198 = por %p196, %p197
      %p199 = scmp.ne.s32.totalorder %s187, %s188
      %p200 = scmp.eq.s32.totalorder %s26, 1
      %p201 = por %p199, %p200
      %p203 = scmp.ne.s32.totalorder %s188, %s202
      %p204 = scmp.eq.s32.totalorder %s26, 0
      %p205 = por %p203, %p204
      %s207 = sadd.s32 %s206, 1
      %p210 = scmp.eq.s32.totalorder %s20, 1
      %p211 = scmp.ne.s32.totalorder %s206, %s208
      %p212 = scmp.eq.s32.totalorder %s20, 0
      %p213 = por %p211, %p212
      %p214 = scmp.ne.s32.totalorder %s206, %s208
      %p215 = scmp.eq.s32.totalorder %s25, 1
      %p216 = por %p214, %p215
      %p217 = scmp.ne.s32.totalorder %s208, %s209
      %p218 = scmp.eq.s32.totalorder %s25, 0
      %p219 = por %p217, %p218
      %p220 = scmp.ne.s32.totalorder %s208, %s209
      %p221 = scmp.eq.s32.totalorder %s26, 1
      %p222 = por %p220, %p221
      %p224 = scmp.ne.s32.totalorder %s209, %s223
      %p225 = scmp.eq.s32.totalorder %s26, 0
      %p226 = por %p224, %p225
      %s228 = sadd.s32 %s227, 1
      %p231 = scmp.eq.s32.totalorder %s20, 1
      %p232 = scmp.ne.s32.totalorder %s227, %s229
      %p233 = scmp.eq.s32.totalorder %s20, 0
      %p234 = por %p232, %p233
      %p235 = scmp.ne.s32.totalorder %s227, %s229
      %p236 = scmp.eq.s32.totalorder %s25, 1
      %p237 = por %p235, %p236
      %p238 = scmp.ne.s32.totalorder %s229, %s230
      %p239 = scmp.eq.s32.totalorder %s25, 0
      %p240 = por %p238, %p239
      %p241 = scmp.ne.s32.totalorder %s229, %s230
      %p242 = scmp.eq.s32.totalorder %s26, 1
      %p243 = por %p241, %p242
      %p245 = scmp.ne.s32.totalorder %s230, %s244
      %p246 = scmp.eq.s32.totalorder %s26, 0
      %p247 = por %p245, %p246
      %s249 = sadd.s32 %s248, 1
      %p252 = scmp.eq.s32.totalorder %s20, 1
      %p253 = scmp.ne.s32.totalorder %s248, %s250
      %p254 = scmp.eq.s32.totalorder %s20, 0
      %p255 = por %p253, %p254
      %p256 = scmp.ne.s32.totalorder %s248, %s250
      %p257 = scmp.eq.s32.totalorder %s25, 1
      %p258 = por %p256, %p257
      %p259 = scmp.ne.s32.totalorder %s250, %s251
      %p260 = scmp.eq.s32.totalorder %s25, 0
      %p261 = por %p259, %p260
      %p262 = scmp.ne.s32.totalorder %s250, %s251
      %p263 = scmp.eq.s32.totalorder %s26, 1
      %p264 = por %p262, %p263
      %p266 = scmp.ne.s32.totalorder %s251, %s265
      %p267 = scmp.eq.s32.totalorder %s26, 0
      %p268 = por %p266, %p267
      %s269 = ssub.s32 %s20, %s27
      %p270 = scmp.eq.s32.totalorder %s269, 0
      %s272 = sadd.s32 %s271, 1
      %s273 = scalar_select %p270, %s271, %s272
      %p276 = pneg %p270
      %p277 = scmp.eq.s32.totalorder %s20, 1
      %p278 = por %p276, %p277
      %p279 = scmp.ne.s32.totalorder %s271, %s274
      %p280 = scmp.eq.s32.totalorder %s20, 0
      %p281 = por %p279, %p280
      %p282 = scmp.ne.s32.totalorder %s271, %s274
      %p283 = scmp.eq.s32.totalorder %s25, 1
      %p284 = por %p282, %p283
      %p285 = scmp.ne.s32.totalorder %s274, %s275
      %p286 = scmp.eq.s32.totalorder %s25, 0
      %p287 = por %p285, %p286
      %p288 = scmp.ne.s32.totalorder %s274, %s275
      %p289 = scmp.eq.s32.totalorder %s26, 1
      %p290 = por %p288, %p289
      %p292 = scmp.ne.s32.totalorder %s275, %s291
      %p293 = scmp.eq.s32.totalorder %s26, 0
      %p294 = por %p292, %p293
      %p295 = scmp.le.s32.totalorder 1, %s20
      %p296 = scmp.lt.s32.totalorder %s20, 3
      %p297 = pnand %p295, %p296
      %p298 = pneg %p297
      // Predicated region
      $region9: #{head_block_forward.5} parent=5 // pred_check
        _
      $region10: #{head_block_forward.5} parent=5 // pred_check_branch
        %300 = sbr.rel (%p297) target = $region12
      $region11: #{head_block_forward.5} parent=5 // pred_region
        %s301 = ssub.s32 %s20, 1
        // Predicated region
        $region13: #{head_block_forward.5} parent=11 // pred_check
          %p302 = pneg %p93
        $region14: #{head_block_forward.5} parent=11 // pred_check_branch
          %304 = sbr.rel (%p302) target = $region16
        $region15: #{head_block_forward.5} parent=11 // pred_region
          _
        $region16: #{head_block_forward.5} parent=11 // pred_fallthru
          _
        // Predicated region
        $region17: #{head_block_forward.5} parent=11 // pred_check
          %p305 = pneg %p114
        $region18: #{head_block_forward.5} parent=11 // pred_check_branch
          %307 = sbr.rel (%p305) target = $region20
        $region19: #{head_block_forward.5} parent=11 // pred_region
          _
        $region20: #{head_block_forward.5} parent=11 // pred_fallthru
          _
        // Predicated region
        $region21: #{head_block_forward.5} parent=11 // pred_check
          %p308 = pneg %p135
        $region22: #{head_block_forward.5} parent=11 // pred_check_branch
          %310 = sbr.rel (%p308) target = $region24
        $region23: #{head_block_forward.5} parent=11 // pred_region
          _
        $region24: #{head_block_forward.5} parent=11 // pred_fallthru
          _
        // Predicated region
        $region25: #{head_block_forward.5} parent=11 // pred_check
          %p311 = pneg %p156
        $region26: #{head_block_forward.5} parent=11 // pred_check_branch
          %313 = sbr.rel (%p311) target = $region28
        $region27: #{head_block_forward.5} parent=11 // pred_region
          _
        $region28: #{head_block_forward.5} parent=11 // pred_fallthru
          _
        // Predicated region
        $region29: #{head_block_forward.5} parent=11 // pred_check
          %p314 = pneg %p177
        $region30: #{head_block_forward.5} parent=11 // pred_check_branch
          %316 = sbr.rel (%p314) target = $region32
        $region31: #{head_block_forward.5} parent=11 // pred_region
          _
        $region32: #{head_block_forward.5} parent=11 // pred_fallthru
          _
        // Predicated region
        $region33: #{head_block_forward.5} parent=11 // pred_check
          %p317 = pneg %p198
        $region34: #{head_block_forward.5} parent=11 // pred_check_branch
          %319 = sbr.rel (%p317) target = $region36
        $region35: #{head_block_forward.5} parent=11 // pred_region
          _
        $region36: #{head_block_forward.5} parent=11 // pred_fallthru
          _
        // Predicated region
        $region37: #{head_block_forward.5} parent=11 // pred_check
          %p320 = pneg %p219
        $region38: #{head_block_forward.5} parent=11 // pred_check_branch
          %322 = sbr.rel (%p320) target = $region40
        $region39: #{head_block_forward.5} parent=11 // pred_region
          _
        $region40: #{head_block_forward.5} parent=11 // pred_fallthru
          _
        // Predicated region
        $region41: #{head_block_forward.5} parent=11 // pred_check
          %p323 = pneg %p240
        $region42: #{head_block_forward.5} parent=11 // pred_check_branch
          %325 = sbr.rel (%p323) target = $region44
        $region43: #{head_block_forward.5} parent=11 // pred_region
          _
        $region44: #{head_block_forward.5} parent=11 // pred_fallthru
          _
        // Predicated region
        $region45: #{head_block_forward.5} parent=11 // pred_check
          %p326 = pneg %p261
        $region46: #{head_block_forward.5} parent=11 // pred_check_branch
          %328 = sbr.rel (%p326) target = $region48
        $region47: #{head_block_forward.5} parent=11 // pred_region
          _
        $region48: #{head_block_forward.5} parent=11 // pred_fallthru
          _
      $region12: #{head_block_forward.5} parent=5 // pred_fallthru
        _
      %p329 = scmp.lt.s32.totalorder %s20, 2
      // Predicated region
      $region49: #{head_block_forward.5} parent=5 // pred_check
        %p330 = pneg %p329
      $region50: #{head_block_forward.5} parent=5 // pred_check_branch
        %332 = sbr.rel (%p330) target = $region52
      $region51: #{head_block_forward.5} parent=5 // pred_region
        // Predicated region
        $region53: #{head_block_forward.5} parent=51 // pred_check
          %p333 = pneg %p40
        $region54: #{head_block_forward.5} parent=51 // pred_check_branch
          %335 = sbr.rel (%p333) target = $region56
        $region55: #{head_block_forward.5} parent=51 // pred_region
          %p336 = scmp.lt.s32.totalorder %s20, 1
          %s337 = scalar_select %p336, %s20, 1
          %s338 = smul.addr %s337, 4
          %s339 = smul.addr %s338, 4
          %s340 = scalar_lea.vmem %s0, %s339
        $region56: #{head_block_forward.5} parent=51 // pred_fallthru
          _
        // Predicated region
        $region57: #{head_block_forward.5} parent=51 // pred_check
          %p341 = pneg %p66
        $region58: #{head_block_forward.5} parent=51 // pred_check_branch
          %343 = sbr.rel (%p341) target = $region60
        $region59: #{head_block_forward.5} parent=51 // pred_region
          %p344 = scmp.lt.s32.totalorder %s20, 1
          %s345 = scalar_select %p344, %s20, 1
          %s346 = smul.addr %s345, 2
          %s347 = smul.addr %s346, 4
          %s348 = scalar_lea.vmem %s1, %s347
        $region60: #{head_block_forward.5} parent=51 // pred_fallthru
          _
      $region52: #{head_block_forward.5} parent=5 // pred_fallthru
        _
      %p349 = scmp.le.s32.totalorder 1, %s20
      %p350 = scmp.lt.s32.totalorder %s20, 3
      %p351 = pnand %p349, %p350
      %p352 = pneg %p351
      // Predicated region
      $region61: #{head_block_forward.5} parent=5 // pred_check
        _
      $region62: #{head_block_forward.5} parent=5 // pred_check_branch
        %354 = sbr.rel (%p351) target = $region64
      $region63: #{head_block_forward.5} parent=5 // pred_region
        %s355 = ssub.s32 %s20, 1
        %p356 = scmp.lt.s32.totalorder %s25, 1
        %s357 = scalar_select %p356, %s25, 1
        %s358 = smul.addr %s357, 4
        %s359 = smul.addr %s358, 4
        %s360 = scalar_lea.vmem %s0, %s359
        %p361 = pneg %p46
        %p362 = pneg %p43
        %p363 = scmp.lt.s32.totalorder %s25, 1
        %s364 = scalar_select %p363, %s25, 1
        %s365 = smul.addr %s364, 2
        %s366 = smul.addr %s365, 4
        %s367 = scalar_lea.vmem %s1, %s366
        %p368 = pneg %p72
        %p369 = pneg %p69
        %p370 = pneg %p93
        %p371 = pneg %p90
        %p372 = pneg %p114
        %p373 = pneg %p111
        %p374 = pneg %p135
        %p375 = pneg %p132
        %p376 = pneg %p156
        %p377 = pneg %p153
        %p378 = pneg %p177
        %p379 = pneg %p174
        %p380 = pneg %p198
        %p381 = pneg %p195
        %p382 = pneg %p219
        %p383 = pneg %p216
        %p384 = pneg %p240
        %p385 = pneg %p237
        %p386 = pneg %p261
        %p387 = pneg %p258
        %p388 = pneg %p287
        %p389 = pneg %p284
        %s390 = sand.u32 %s274, 1
        %s391 = scalar_lea.sflag [#allocation3], %s390
        %s392 = sand.u32 %s274, 1
        %s393 = smul.addr %s392, 16
        %s394 = scalar_lea.vmem [#allocation2], %s393
        %p395 = scmp.lt.s32.totalorder %s25, 1
        %s396 = scalar_select %p395, %s25, 1
        %s397 = smul.addr %s396, 4
        %s398 = smul.addr %s397, 4
        %s399 = scalar_lea.vmem %s0, %s398
        %p400 = scmp.lt.s32.totalorder %s25, 1
        %s401 = scalar_select %p400, %s25, 1
        %s402 = smul.addr %s401, 2
        %s403 = smul.addr %s402, 4
        %s404 = scalar_lea.vmem %s1, %s403
        %v406 = vld [vmem:[%s399] sm:$0xff]
        %v407 = vld [vmem:[%s399 + $0x8] sm:$0xff]
        %v408 = vld [vmem:[%s2] sm:$0xf]
        %v409 = vld [vmem:[%s2 + $0x4] sm:$0xf]
        %v410 = vld [vmem:[%s2 + $0x8] sm:$0xf]
        %v411 = vld [vmem:[%s2 + $0xc] sm:$0xf]
        %v412 = vld [vmem:[%s2 + $0x10] sm:$0xf]
        %v413 = vld [vmem:[%s2 + $0x14] sm:$0xf]
        %v414 = vld [vmem:[%s2 + $0x18] sm:$0xf]
        %v415 = vld [vmem:[%s2 + $0x1c] sm:$0xf]
        %v416 = vld [vmem:[%s2 + $0x20] sm:$0xf]
        %v417 = vld [vmem:[%s2 + $0x24] sm:$0xf]
        %v418 = vld [vmem:[%s2 + $0x28] sm:$0xf]
        %v419 = vld [vmem:[%s2 + $0x2c] sm:$0xf]
        %v420 = vld [vmem:[%s2 + $0x30] sm:$0xf]
        %v421 = vld [vmem:[%s2 + $0x34] sm:$0xf]
        %v422 = vld [vmem:[%s2 + $0x38] sm:$0xf]
        %v423 = vld [vmem:[%s2 + $0x3c] sm:$0xf]
        %v424 = vld [vmem:[%s2 + $0x40] sm:$0xf]
        %v425 = vld [vmem:[%s2 + $0x44] sm:$0xf]
        %v426 = vld [vmem:[%s3] sm:$0x7]
        %v427 = vld [vmem:[%s4] sm:$0xf]
        %v428 = vld [vmem:[%s4 + $0x4] sm:$0xf]
        %v429 = vld [vmem:[%s5] sm:$0x7]
        %v432 = vunpack.c.l.b16 %v406
        %v433 = vunpack.c.h.b16 %v406
        %v434 = vunpack.c.l.b16 %v407
        %v435 = vunpack.c.h.b16 %v407
        %v436 = vpack.c.b16 %v434, %v432
        %v437 = vpack.c.b16 %v435, %v433
        %v457 = vunpack.c.l.b16 %v408
        %v458 = vunpack.c.l.b16 %v409
        %v459 = vunpack.c.l.b16 %v410
        %v460 = vunpack.c.l.b16 %v411
        %v461 = vunpack.c.l.b16 %v412
        %v462 = vunpack.c.l.b16 %v413
        %v463 = vunpack.c.l.b16 %v414
        %v464 = vunpack.c.l.b16 %v415
        %v465 = vunpack.c.l.b16 %v416
        %v466 = vunpack.c.l.b16 %v417
        %v467 = vunpack.c.l.b16 %v418
        %v468 = vunpack.c.l.b16 %v419
        %v469 = vunpack.c.l.b16 %v420
        %v470 = vunpack.c.l.b16 %v421
        %v471 = vunpack.c.l.b16 %v422
        %v472 = vunpack.c.l.b16 %v423
        %v473 = vunpack.c.l.b16 %v424
        %v474 = vunpack.c.l.b16 %v425
        %v475 = vpack.c.b16 %v458, %v457
        %v476 = vpack.c.b16 %v460, %v459
        %v477 = vpack.c.b16 %v462, %v461
        %v478 = vpack.c.b16 %v464, %v463
        %v479 = vpack.c.b16 %v466, %v465
        %v480 = vpack.c.b16 %v468, %v467
        %v481 = vpack.c.b16 %v470, %v469
        %v482 = vpack.c.b16 %v472, %v471
        %v483 = vpack.c.b16 %v474, %v473
        %vm493 = vcmask 130048
        %v495 = vsel %vm493, %v437, 0
        %497 = vmatprep.subr.bf16.mxu0 0
        %498 = vmatpush1.bf16.msra.mxu0 %v482
        %499 = vmatprep.subr.bf16.mxu0 0
        %500 = vmatpush1.bf16.msra.mxu0 %v481
        %501 = vmatprep.subr.bf16.mxu0 0
        %502 = vmatpush1.bf16.msra.mxu0 %v480
        %503 = vmatprep.subr.bf16.mxu0 0
        %504 = vmatpush1.bf16.msra.mxu0 %v479
        %505 = vmatprep.subr.bf16.mxu0 0
        %506 = vmatpush1.bf16.msra.mxu0 %v478
        %507 = vmatprep.subr.bf16.mxu0 0
        %508 = vmatpush1.bf16.msra.mxu0 %v477
        %509 = vmatprep.subr.bf16.mxu0 0
        %510 = vmatpush1.bf16.msra.mxu0 %v476
        %511 = vmatprep.subr.bf16.mxu0 0
        %512 = vmatpush1.bf16.msra.mxu0 %v475
        %513 = vmatprep.subr.bf16.mxu0 0
        %514 = vmatpush2.bf16.msra.mxu0 0
        %515 = vmatprep.subr.bf16.mxu0 0
        %516 = vmatpush2.bf16.msra.mxu0 0
        %517 = vmatprep.subr.bf16.mxu0 0
        %518 = vmatpush2.bf16.msra.mxu0 0
        %519 = vmatprep.subr.bf16.mxu0 0
        %520 = vmatpush2.bf16.msra.mxu0 0
        %521 = vmatprep.subr.bf16.mxu0 0
        %522 = vmatpush2.bf16.msra.mxu0 0
        %523 = vmatprep.subr.bf16.mxu0 0
        %524 = vmatpush2.bf16.msra.mxu0 0
        %525 = vmatprep.subr.bf16.mxu0 0
        %526 = vmatpush2.bf16.msra.mxu0 0
        %527 = vmatprep.subr.bf16.mxu0 0
        %528 = vmatpush2.bf16.msra.mxu0 %v483
        %529 = vmatprep.mubr.bf16.mxu0 %v495
        %530 = vmatmul.mubr.bf16.gmra.mxu0 %v436
        %v531 = vpop.f32.mrf.mxu0
        %v532 = vadd.f32 0.0, %v531
        %v533 = vpop.f32.mrf.mxu0
        %v534 = vpop.f32.mrf.mxu0
        %v535 = vadd.f32 0.0, %v534
        %v536 = vpop.f32.mrf.mxu0
        %537 = vdwg.mxu0
        %v538 = vlaneseq
        %v539 = vshrl.u32 %v538, 7
        %v540 = vsub.s32 0, %v539
        %v541 = vrot.slane %v426, %v540
        %v542 = vmul.f32 %v532, %v541
        %v543 = vmul.f32 %v535, %v541
        %v544 = vlaneseq
        %v545 = vshrl.u32 %v544, 7
        %v546 = vsub.s32 1, %v545
        %v547 = vrot.slane %v426, %v546
        %v548 = vadd.f32 %v542, %v547
        %v549 = vadd.f32 %v543, %v547
        %vm550 = vcmp.gt.f32.partialorder %v548, 0.0
        %vm551 = vcmp.gt.f32.partialorder %v549, 0.0
        %v552 = vlaneseq
        %v553 = vshrl.u32 %v552, 7
        %v554 = vsub.s32 2, %v553
        %v555 = vrot.slane %v426, %v554
        %v556 = vmul.f32 %v548, %v555
        %v557 = vmul.f32 %v549, %v555
        %v558 = vsel %vm550, %v548, %v556
        %v559 = vsel %vm551, %v549, %v557
        %v560 = vpack.c.bf16 %v559, %v558
        %v563 = vunpack.c.l.b16 %v427
        %v564 = vunpack.c.l.b16 %v428
        %v565 = vpack.c.b16 %v564, %v563
        %v568 = vsel %vm493, %v560, 0
        %570 = vmatprep.subr.bf16.mxu0 0
        %571 = vmatpush1.bf16.msra.mxu0 0
        %572 = vmatprep.subr.bf16.mxu0 0
        %573 = vmatpush1.bf16.msra.mxu0 0
        %574 = vmatprep.subr.bf16.mxu0 0
        %575 = vmatpush1.bf16.msra.mxu0 0
        %576 = vmatprep.subr.bf16.mxu0 0
        %577 = vmatpush1.bf16.msra.mxu0 0
        %578 = vmatprep.subr.bf16.mxu0 0
        %579 = vmatpush1.bf16.msra.mxu0 0
        %580 = vmatprep.subr.bf16.mxu0 0
        %581 = vmatpush1.bf16.msra.mxu0 0
        %582 = vmatprep.subr.bf16.mxu0 0
        %583 = vmatpush1.bf16.msra.mxu0 0
        %584 = vmatprep.subr.bf16.mxu0 0
        %585 = vmatpush1.bf16.msra.mxu0 %v565
        %586 = vmatprep.subr.bf16.mxu0 0
        %587 = vmatpush2.bf16.msra.mxu0 0
        %588 = vmatprep.subr.bf16.mxu0 0
        %589 = vmatpush2.bf16.msra.mxu0 0
        %590 = vmatprep.subr.bf16.mxu0 0
        %591 = vmatpush2.bf16.msra.mxu0 0
        %592 = vmatprep.subr.bf16.mxu0 0
        %593 = vmatpush2.bf16.msra.mxu0 0
        %594 = vmatprep.subr.bf16.mxu0 0
        %595 = vmatpush2.bf16.msra.mxu0 0
        %596 = vmatprep.subr.bf16.mxu0 0
        %597 = vmatpush2.bf16.msra.mxu0 0
        %598 = vmatprep.subr.bf16.mxu0 0
        %599 = vmatpush2.bf16.msra.mxu0 0
        %600 = vmatprep.subr.bf16.mxu0 0
        %601 = vmatpush2.bf16.msra.mxu0 0
        %602 = vmatprep.mubr.bf16.mxu0 0
        %603 = vmatmul.mubr.bf16.gmra.mxu0 %v568
        %v604 = vpop.f32.mrf.mxu0
        %v605 = vadd.f32 0.0, %v604
        %v606 = vpop.f32.mrf.mxu0
        %v607 = vpop.f32.mrf.mxu0
        %v608 = vadd.f32 0.0, %v607
        %v609 = vpop.f32.mrf.mxu0
        %610 = vdwg.mxu0
        %v611 = vlaneseq
        %v612 = vshrl.u32 %v611, 7
        %v613 = vsub.s32 0, %v612
        %v614 = vrot.slane %v429, %v613
        %v615 = vmul.f32 %v605, %v614
        %v616 = vmul.f32 %v608, %v614
        %v617 = vlaneseq
        %v618 = vshrl.u32 %v617, 7
        %v619 = vsub.s32 1, %v618
        %v620 = vrot.slane %v429, %v619
        %v621 = vadd.f32 %v615, %v620
        %v622 = vadd.f32 %v616, %v620
        %vm623 = vcmp.gt.f32.partialorder %v621, 0.0
        %vm624 = vcmp.gt.f32.partialorder %v622, 0.0
        %v625 = vlaneseq
        %v626 = vshrl.u32 %v625, 7
        %v627 = vsub.s32 2, %v626
        %v628 = vrot.slane %v429, %v627
        %v629 = vmul.f32 %v621, %v628
        %v630 = vmul.f32 %v622, %v628
        %v631 = vsel %vm623, %v621, %v629
        %v632 = vsel %vm624, %v622, %v630
        %v633 = vsel %vm493, %v631, 0.0
        %v634 = vsel %vm493, %v632, 0.0
        %v635 = vadd.f32 %v633, %v634
        %v636 = vrot.slane %v635, 4
        %v637 = vadd.f32 %v635, %v636
        %v638 = vrot.slane %v637, 2
        %v639 = vadd.f32 %v637, %v638
        %v640 = vrot.slane %v639, 1
        %v641 = vadd.f32 %v639, %v640
        %v642 = vmul.f32 %v641, 0.0625
        %v643 = vld [vmem:[%s6] sm:$0xff]
        %v644 = vld [vmem:[%s6 + $0x8] sm:$0xff]
        %v645 = vld [vmem:[%s7] sm:$0x1]
        %v647 = vsel %vm493, %v642, 0
        %649 = vmatprep.subr.mxu0 0.0
        %650 = vmatpush1.msra.mxu0 0.0
        %651 = vmatprep.subr.mxu0 0.0
        %652 = vmatpush1.msra.mxu0 0.0
        %653 = vmatprep.subr.mxu0 0.0
        %654 = vmatpush1.msra.mxu0 0.0
        %655 = vmatprep.subr.mxu0 0.0
        %656 = vmatpush1.msra.mxu0 0.0
        %657 = vmatprep.subr.mxu0 0.0
        %658 = vmatpush1.msra.mxu0 0.0
        %659 = vmatprep.subr.mxu0 0.0
        %660 = vmatpush1.msra.mxu0 0.0
        %661 = vmatprep.subr.mxu0 0.0
        %662 = vmatpush1.msra.mxu0 0.0
        %663 = vmatprep.subr.mxu0 0.0
        %664 = vmatpush1.msra.mxu0 0.0
        %665 = vmatprep.subr.mxu0 0.0
        %666 = vmatpush1.msra.mxu0 0.0
        %667 = vmatprep.subr.mxu0 0.0
        %668 = vmatpush1.msra.mxu0 0.0
        %669 = vmatprep.subr.mxu0 0.0
        %670 = vmatpush1.msra.mxu0 0.0
        %671 = vmatprep.subr.mxu0 0.0
        %672 = vmatpush1.msra.mxu0 0.0
        %673 = vmatprep.subr.mxu0 0.0
        %674 = vmatpush1.msra.mxu0 0.0
        %675 = vmatprep.subr.mxu0 0.0
        %676 = vmatpush1.msra.mxu0 0.0
        %677 = vmatprep.subr.mxu0 0.0
        %678 = vmatpush1.msra.mxu0 %v644
        %679 = vmatprep.subr.mxu0 0.0
        %680 = vmatpush1.msra.mxu0 %v643
        %681 = vmatprep.subr.mxu0 0.0
        %682 = vmatpush2.msra.mxu0 0.0
        %683 = vmatprep.subr.mxu0 0.0
        %684 = vmatpush2.msra.mxu0 0.0
        %685 = vmatprep.subr.mxu0 0.0
        %686 = vmatpush2.msra.mxu0 0.0
        %687 = vmatprep.subr.mxu0 0.0
        %688 = vmatpush2.msra.mxu0 0.0
        %689 = vmatprep.subr.mxu0 0.0
        %690 = vmatpush2.msra.mxu0 0.0
        %691 = vmatprep.subr.mxu0 0.0
        %692 = vmatpush2.msra.mxu0 0.0
        %693 = vmatprep.subr.mxu0 0.0
        %694 = vmatpush2.msra.mxu0 0.0
        %695 = vmatprep.subr.mxu0 0.0
        %696 = vmatpush2.msra.mxu0 0.0
        %697 = vmatprep.subr.mxu0 0.0
        %698 = vmatpush2.msra.mxu0 0.0
        %699 = vmatprep.subr.mxu0 0.0
        %700 = vmatpush2.msra.mxu0 0.0
        %701 = vmatprep.subr.mxu0 0.0
        %702 = vmatpush2.msra.mxu0 0.0
        %703 = vmatprep.subr.mxu0 0.0
        %704 = vmatpush2.msra.mxu0 0.0
        %705 = vmatprep.subr.mxu0 0.0
        %706 = vmatpush2.msra.mxu0 0.0
        %707 = vmatprep.subr.mxu0 0.0
        %708 = vmatpush2.msra.mxu0 0.0
        %709 = vmatprep.subr.mxu0 0.0
        %710 = vmatpush2.msra.mxu0 0.0
        %711 = vmatprep.subr.mxu0 0.0
        %712 = vmatpush2.msra.mxu0 0.0
        %713 = vmatprep.mubr.f32.mxu0 0.0
        %714 = vmatmul.mubr.f32.gmra.mxu0 %v647
        %v715 = vpop.f32.mrf.mxu0
        %v716 = vadd.f32 %v645, %v715
        %v717 = vpop.f32.mrf.mxu0
        %718 = vdwg.mxu0
        %vm719 = vcmp.gt.f32.partialorder %v716, 0.0
        %v720 = vld [vmem:[%s7 + $0x1] sm:$0x1]
        %v721 = vmul.f32 %v716, %v720
        %v722 = vsel %vm719, %v716, %v721
        %v723 = vld [vmem:[%s8] sm:$0xf]
        %v724 = vld [vmem:[%s9] sm:$0x1]
        %vm725 = vcmask 31744
        %v727 = vsel %vm725, %v722, 0
        %vm729 = vcmask 1043456
        %v731 = vsel %vm729, %v723, 0
        %733 = vmatprep.subr.mxu0 0.0
        %734 = vmatpush1.msra.mxu0 0.0
        %735 = vmatprep.subr.mxu0 0.0
        %736 = vmatpush1.msra.mxu0 0.0
        %737 = vmatprep.subr.mxu0 0.0
        %738 = vmatpush1.msra.mxu0 0.0
        %739 = vmatprep.subr.mxu0 0.0
        %740 = vmatpush1.msra.mxu0 0.0
        %741 = vmatprep.subr.mxu0 0.0
        %742 = vmatpush1.msra.mxu0 0.0
        %743 = vmatprep.subr.mxu0 0.0
        %744 = vmatpush1.msra.mxu0 0.0
        %745 = vmatprep.subr.mxu0 0.0
        %746 = vmatpush1.msra.mxu0 0.0
        %747 = vmatprep.subr.mxu0 0.0
        %748 = vmatpush1.msra.mxu0 0.0
        %749 = vmatprep.subr.mxu0 0.0
        %750 = vmatpush1.msra.mxu0 0.0
        %751 = vmatprep.subr.mxu0 0.0
        %752 = vmatpush1.msra.mxu0 0.0
        %753 = vmatprep.subr.mxu0 0.0
        %754 = vmatpush1.msra.mxu0 0.0
        %755 = vmatprep.subr.mxu0 0.0
        %756 = vmatpush1.msra.mxu0 0.0
        %757 = vmatprep.subr.mxu0 0.0
        %758 = vmatpush1.msra.mxu0 0.0
        %759 = vmatprep.subr.mxu0 0.0
        %760 = vmatpush1.msra.mxu0 0.0
        %761 = vmatprep.subr.mxu0 0.0
        %762 = vmatpush1.msra.mxu0 0.0
        %763 = vmatprep.subr.mxu0 0.0
        %764 = vmatpush1.msra.mxu0 %v731
        %765 = vmatprep.subr.mxu0 0.0
        %766 = vmatpush2.msra.mxu0 0.0
        %767 = vmatprep.subr.mxu0 0.0
        %768 = vmatpush2.msra.mxu0 0.0
        %769 = vmatprep.subr.mxu0 0.0
        %770 = vmatpush2.msra.mxu0 0.0
        %771 = vmatprep.subr.mxu0 0.0
        %772 = vmatpush2.msra.mxu0 0.0
        %773 = vmatprep.subr.mxu0 0.0
        %774 = vmatpush2.msra.mxu0 0.0
        %775 = vmatprep.subr.mxu0 0.0
        %776 = vmatpush2.msra.mxu0 0.0
        %777 = vmatprep.subr.mxu0 0.0
        %778 = vmatpush2.msra.mxu0 0.0
        %779 = vmatprep.subr.mxu0 0.0
        %780 = vmatpush2.msra.mxu0 0.0
        %781 = vmatprep.subr.mxu0 0.0
        %782 = vmatpush2.msra.mxu0 0.0
        %783 = vmatprep.subr.mxu0 0.0
        %784 = vmatpush2.msra.mxu0 0.0
        %785 = vmatprep.subr.mxu0 0.0
        %786 = vmatpush2.msra.mxu0 0.0
        %787 = vmatprep.subr.mxu0 0.0
        %788 = vmatpush2.msra.mxu0 0.0
        %789 = vmatprep.subr.mxu0 0.0
        %790 = vmatpush2.msra.mxu0 0.0
        %791 = vmatprep.subr.mxu0 0.0
        %792 = vmatpush2.msra.mxu0 0.0
        %793 = vmatprep.subr.mxu0 0.0
        %794 = vmatpush2.msra.mxu0 0.0
        %795 = vmatprep.subr.mxu0 0.0
        %796 = vmatpush2.msra.mxu0 0.0
        %797 = vmatprep.mubr.f32.mxu0 0.0
        %798 = vmatmul.mubr.f32.gmra.mxu0 %v727
        %v799 = vpop.f32.mrf.mxu0
        %v800 = vadd.f32 %v724, %v799
        %v801 = vpop.f32.mrf.mxu0
        %802 = vdwg.mxu0
        %v803 = vxor.u32 %v800, 2147483648
        %v804 = vmul.f32 %v803, 1.442695
        %v805 = vpow.pop %v804
        %v806 = vadd.f32 %v805, 1.0
        %v807 = vrcp.pop %v806
        %v808 = vmul.f32 1.0, %v807
        %v809 = vlaneseq
        %v810 = vshrl.u32 %v809, 7
        %v811 = vsub.s32 0, %v810
        %v812 = vrot.slane %v808, %v811
        %v813 = vmul.f32 %v631, %v812
        %v814 = vmul.f32 %v632, %v812
        %v815 = vld [vmem:[%s404] sm:$0xf]
        %v816 = vld [vmem:[%s404 + $0x4] sm:$0xf]
        %v817 = vunpack.c.l.bf16 %v815
        %v818 = vunpack.c.l.bf16 %v816
        %v819 = vadd.f32 %v813, %v817
        %v820 = vadd.f32 %v814, %v818
        %vm821 = vcmp.gt.f32.partialorder %v819, 0.0
        %vm822 = vcmp.gt.f32.partialorder %v820, 0.0
        %v823 = vld [vmem:[%s10] sm:$0x1]
        %v825 = vlaneseq
        %v826 = vshrl.u32 %v825, 7
        %v827 = vsub.s32 0, %v826
        %v828 = vrot.slane %v823, %v827
        %v830 = vmul.f32 %v819, %v828
        %v831 = vmul.f32 %v820, %v828
        %v832 = vsel %vm821, %v819, %v830
        %v833 = vsel %vm822, %v820, %v831
        %834 = vst.msk [vmem:[%s394] sm:$0xff] %vm493, %v832
        %835 = vst.msk [vmem:[%s394 + $0x8] sm:$0xff] %vm493, %v833
        %s836 = sand.u32 %s274, 1
        %s837 = scalar_lea.sflag [#allocation3], %s836
        %s838 = sand.u32 %s274, 1
        %s839 = smul.addr %s838, 16
        %s840 = scalar_lea.vmem [#allocation2], %s839
        // Predicated region
        $region65: #{head_block_forward.5} parent=63 // pred_check
          %p841 = pneg %p284
        $region66: #{head_block_forward.5} parent=63 // pred_check_branch
          %843 = sbr.rel (%p841) target = $region68
        $region67: #{head_block_forward.5} parent=63 // pred_region
          %s845 = ssub.s32 256, 256
          %846 = vsyncadd %s837, %s845
          %s847 = smul.addr %s25, 2
          %s848 = smul.addr %s847, 128
          %s849 = scalar_lea.hbm %s11, %s848
          %s850 = sshll.u32 %s840, 4
          %s851 = int_to_ptr.vmem [resolvable:$true] %s850
          %856 = dma.vmem_to_hbm [thread:$0]  %s851, 256, %s849, %s837, 128, 128, 8
        $region68: #{head_block_forward.5} parent=63 // pred_fallthru
          _
      $region64: #{head_block_forward.5} parent=5 // pred_fallthru
        _
      %p857 = scmp.le.s32.totalorder 2, %s20
      // Predicated region
      $region69: #{head_block_forward.5} parent=5 // pred_check
        %p858 = pneg %p857
      $region70: #{head_block_forward.5} parent=5 // pred_check_branch
        %860 = sbr.rel (%p858) target = $region72
      $region71: #{head_block_forward.5} parent=5 // pred_region
        %s861 = ssub.s32 %s20, 2
        // Predicated region
        $region73: #{head_block_forward.5} parent=71 // pred_check
          %p862 = pneg %p290
        $region74: #{head_block_forward.5} parent=71 // pred_check_branch
          %864 = sbr.rel (%p862) target = $region76
        $region75: #{head_block_forward.5} parent=71 // pred_region
          %s865 = sand.u32 %s275, 1
          %s866 = scalar_lea.sflag [#allocation3], %s865
          %s867 = sand.u32 %s275, 1
          %s868 = smul.addr %s867, 16
          %s869 = scalar_lea.vmem [#allocation2], %s868
          %870 = dma.done %s866, 256
        $region76: #{head_block_forward.5} parent=71 // pred_fallthru
          _
      $region72: #{head_block_forward.5} parent=5 // pred_fallthru
        _
    $region6: #{head_block_forward.5} parent=1 // loop_footer
      %s24 = sadd.s32 1, %s20
    $region7: #{head_block_forward.5} parent=1 // loop_footer_branch
      %19 = sbr.rel target = $region3
    $region8: #{head_block_forward.5} parent=1 // loop_exit
      _
    %871 = vsyncpa [#allocation3], 1
    %s872 = scalar_lea.sflag [#allocation3], 1
    %873 = vsyncpa %s872, 1

</llo_original>
